<compile_context>
chip_gen: v6e
topology: v6e:2x2x1
jax: 0.10.0
libtpu: 0.0.40
codegen_flags: <defaults>
</compile_context>

<pallas_src>
import functools

import jax
import jax.numpy as jnp
from jax.experimental import pallas as pl
from jax.experimental.pallas import tpu as pltpu

_LANE = 128
_MASK_VALUE = -1e30  # large negative instead of -inf for masked logit columns
_HIGHEST = jax.lax.Precision.HIGHEST


def _round_up(x, m):
    return ((x + m - 1) // m) * m


def _pad2d(a, rows, cols):
    r, c = a.shape
    if r == rows and c == cols:
        return a
    return jnp.pad(a, ((0, rows - r), (0, cols - c)))


def _split_hi_lo(a):
    """Split an f32 array into a bf16 hi/lo pair with hi + lo ~= a (~f32 exact)."""
    hi = a.astype(jnp.bfloat16)
    lo = (a - hi.astype(jnp.float32)).astype(jnp.bfloat16)
    return hi, lo


def _vmem_limit_bytes(buffer_bytes):
    """Scoped-VMEM limit derived from actual buffer sizes (+headroom), not chip size."""
    est = 2 * int(sum(buffer_bytes)) + (8 << 20)  # x2: worst-case double buffering
    return int(max(32 << 20, min(est, 100 << 20)))


# ----------------------------------------------------------------------------
# Layer 1 kernel:  out_hi/lo = bf16_split( relu(adj_tile @ XW1) @ W2 )
# ----------------------------------------------------------------------------
def _layer1_kernel(xw_hi_ref, xw_lo_ref, w2_hi_ref, w2_lo_ref, adj_ref,
                   out_hi_ref, out_lo_ref):
    """xw_*_ref : (Np, Hp) bf16, grid-invariant (resident, DMA'd once)
    w2_*_ref : (Hp, Cp) bf16, grid-invariant
    adj_ref  : (tm, Np) int8, exact 0/1 -- the only streamed operand
    out_*    : (tm, Cp) bf16 hi/lo pair (layer-2 input, already projected)
    """
    adj = adj_ref[...].astype(jnp.bfloat16)  # 0/1 values: exact in bf16
    acc = jnp.dot(adj, xw_hi_ref[...], preferred_element_type=jnp.float32)
    acc = acc + jnp.dot(adj, xw_lo_ref[...], preferred_element_type=jnp.float32)
    h = jnp.maximum(acc, 0.0)

    # Fused second projection (h @ W2) kept ~f32-exact via bf16 hi/lo MXU
    # matmuls (the dropped h_lo @ w2_lo term is O(2^-18) relative).
    h_hi, h_lo = _split_hi_lo(h)
    xw2 = jnp.dot(h_hi, w2_hi_ref[...], preferred_element_type=jnp.float32)
    xw2 = xw2 + jnp.dot(h_hi, w2_lo_ref[...], preferred_element_type=jnp.float32)
    xw2 = xw2 + jnp.dot(h_lo, w2_hi_ref[...], preferred_element_type=jnp.float32)

    o_hi, o_lo = _split_hi_lo(xw2)
    out_hi_ref[...] = o_hi
    out_lo_ref[...] = o_lo


def _layer1_call(xw1_hi, xw1_lo, w2_hi, w2_lo, adj_i8, *, tm):
    n_pad, h_pad = xw1_hi.shape
    c_pad = w2_hi.shape[1]
    assert n_pad % tm == 0
    grid = (n_pad // tm,)

    flops = 2 * n_pad * n_pad * h_pad * 2 + 2 * n_pad * h_pad * c_pad * 3
    bytes_accessed = (n_pad * n_pad * 1            # streamed int8 adjacency
                      + 2 * n_pad * h_pad * 2      # resident xw hi/lo (DMA'd once)
                      + 2 * h_pad * c_pad * 2      # resident w2 hi/lo
                      + 2 * n_pad * c_pad * 2)     # bf16 hi/lo outputs

    vmem_limit = _vmem_limit_bytes([
        2 * n_pad * h_pad * 2,                  # xw hi/lo (resident)
        2 * h_pad * c_pad * 2,                  # w2 hi/lo (resident)
        tm * n_pad * 1,                         # adj int8 tile
        tm * n_pad * 2,                         # adj bf16 cast temp
        2 * tm * h_pad * 4,                     # f32 acc / relu temps
        2 * tm * c_pad * 2 + tm * c_pad * 4,    # out tiles + xw2 temp
    ])

    # NOTE: the grid-invariant bf16 operands are DMA'd only once (constant
    # index_map).  pipeline_mode=pl.Buffered(1) could pin them to a single
    # buffer for extra VMEM headroom if needed.
    return pl.pallas_call(
        _layer1_kernel,
        out_shape=(jax.ShapeDtypeStruct((n_pad, c_pad), jnp.bfloat16),
                   jax.ShapeDtypeStruct((n_pad, c_pad), jnp.bfloat16)),
        grid_spec=pltpu.PrefetchScalarGridSpec(
            num_scalar_prefetch=0,
            grid=grid,
            in_specs=[
                pl.BlockSpec((n_pad, h_pad), lambda i: (0, 0)),   # xw1_hi
                pl.BlockSpec((n_pad, h_pad), lambda i: (0, 0)),   # xw1_lo
                pl.BlockSpec((h_pad, c_pad), lambda i: (0, 0)),   # w2_hi
                pl.BlockSpec((h_pad, c_pad), lambda i: (0, 0)),   # w2_lo
                pl.BlockSpec((tm, n_pad), lambda i: (i, 0)),      # adj row tile
            ],
            out_specs=(
                pl.BlockSpec((tm, c_pad), lambda i: (i, 0)),
                pl.BlockSpec((tm, c_pad), lambda i: (i, 0)),
            ),
        ),
        compiler_params=pltpu.CompilerParams(
            dimension_semantics=("parallel",),      # megacore shards row tiles
            vmem_limit_bytes=vmem_limit,
        ),
        cost_estimate=pl.CostEstimate(
            flops=int(flops), transcendentals=0,
            bytes_accessed=int(bytes_accessed)),
    )(xw1_hi, xw1_lo, w2_hi, w2_lo, adj_i8)


# ----------------------------------------------------------------------------
# Layer 2 kernel:  out = log_softmax( adj_tile @ XW2 ) over the valid columns
# ----------------------------------------------------------------------------
def _layer2_kernel(xw_hi_ref, xw_lo_ref, adj_ref, out_ref, *, valid_cols):
    adj = adj_ref[...].astype(jnp.bfloat16)
    logits = jnp.dot(adj, xw_hi_ref[...], preferred_element_type=jnp.float32)
    logits = logits + jnp.dot(adj, xw_lo_ref[...],
                              preferred_element_type=jnp.float32)

    # Mask padded class columns so they don't pollute the softmax sum.
    if valid_cols < logits.shape[1]:
        col = jax.lax.broadcasted_iota(jnp.int32, logits.shape, 1)
        logits = jnp.where(col < valid_cols, logits, _MASK_VALUE)

    m = jnp.max(logits, axis=1, keepdims=True)
    shifted = logits - m
    lse = jnp.log(jnp.sum(jnp.exp(shifted), axis=1, keepdims=True))
    out_ref[...] = (shifted - lse).astype(out_ref.dtype)


def _layer2_call(xw2_hi, xw2_lo, adj_i8, *, valid_cols, tm):
    n_pad, c_pad = xw2_hi.shape
    assert n_pad % tm == 0
    grid = (n_pad // tm,)

    flops = 2 * n_pad * n_pad * c_pad * 2
    transcendentals = n_pad * c_pad
    bytes_accessed = (n_pad * n_pad * 1
                      + 2 * n_pad * c_pad * 2
                      + n_pad * c_pad * 4)

    vmem_limit = _vmem_limit_bytes([
        2 * n_pad * c_pad * 2,      # xw2 hi/lo (resident)
        tm * n_pad * 1,             # adj int8 tile
        tm * n_pad * 2,             # adj bf16 cast temp
        2 * tm * c_pad * 4,         # logits temp + f32 out tile
    ])

    kernel = functools.partial(_layer2_kernel, valid_cols=valid_cols)

    return pl.pallas_call(
        kernel,
        out_shape=jax.ShapeDtypeStruct((n_pad, c_pad), jnp.float32),
        grid_spec=pltpu.PrefetchScalarGridSpec(
            num_scalar_prefetch=0,
            grid=grid,
            in_specs=[
                pl.BlockSpec((n_pad, c_pad), lambda i: (0, 0)),   # xw2_hi
                pl.BlockSpec((n_pad, c_pad), lambda i: (0, 0)),   # xw2_lo
                pl.BlockSpec((tm, n_pad), lambda i: (i, 0)),      # adj row tile
            ],
            out_specs=pl.BlockSpec((tm, c_pad), lambda i: (i, 0)),
        ),
        compiler_params=pltpu.CompilerParams(
            dimension_semantics=("parallel",),
            vmem_limit_bytes=vmem_limit,
        ),
        cost_estimate=pl.CostEstimate(
            flops=int(flops), transcendentals=int(transcendentals),
            bytes_accessed=int(bytes_accessed)),
    )(xw2_hi, xw2_lo, adj_i8)


# ----------------------------------------------------------------------------
# GNN forward: projections hoisted / fused, aggregation in Pallas.
# ----------------------------------------------------------------------------
def gnn_forward(x, adj, w1, w2, *, tm=128):
    """x: (N,F) f32, adj: (N,N) dense 0/1, w1: (F,H), w2: (H,C) stored [in,out].

    Matches torch: log_softmax( adj @ relu(adj @ (x @ W1)) @ W2, dim=1 ).

    `tm` (row tile) must be a multiple of 128.  VMEM per call is roughly
    3*tm*N_pad bytes (double-buffered int8 adj + bf16 cast temp) plus
    4*N_pad*D bytes (resident bf16 xw hi/lo), so at FacebookPagePage scale
    (N ~ 22.5k, D = 128) tm=128 fits v7x's 64 MiB/TC; tm=256-512 is fine on
    v5e/v6e's 128 MiB.
    """
    n = x.shape[0]
    h_dim = w1.shape[1]
    c_dim = w2.shape[1]
    assert tm % _LANE == 0, "tm must be a multiple of 128"

    n_pad = _round_up(n, tm)
    h_pad = _round_up(h_dim, _LANE)
    c_pad = _round_up(c_dim, _LANE)

    # Adjacency: cast to int8 BEFORE padding (values are exactly 0/1, so the
    # cast is lossless and no N_pad^2 f32 intermediate is materialized).
    # Built once and streamed by both layers.
    adj_i8 = _pad2d(adj.astype(jnp.int8), n_pad, n_pad)

    # Zero-padding is exact: padded adj rows/cols and weight rows/cols are 0.
    x_p = _pad2d(x.astype(jnp.float32), n_pad, x.shape[1])
    w1_p = _pad2d(w1.astype(jnp.float32), w1.shape[0], h_pad)
    w2_p = _pad2d(w2.astype(jnp.float32), h_pad, c_pad)

    # Layer-1 projection hoisted out of the kernel (grid-invariant work), then
    # split into bf16 hi/lo so the in-kernel MXU runs at bf16 rate while the
    # result stays ~f32-exact.
    xw1 = jnp.dot(x_p, w1_p, preferred_element_type=jnp.float32,
                  precision=_HIGHEST)
    xw1_hi, xw1_lo = _split_hi_lo(xw1)
    w2_hi, w2_lo = _split_hi_lo(w2_p)

    # Layer 1 aggregation + relu with the layer-2 projection fused into the
    # epilogue: emits xw2 = relu(adj @ xw1) @ W2 directly as a bf16 hi/lo pair
    # (the hidden activation h never round-trips HBM).
    xw2_hi, xw2_lo = _layer1_call(xw1_hi, xw1_lo, w2_hi, w2_lo, adj_i8, tm=tm)

    # Layer 2 aggregation + masked log_softmax.
    out = _layer2_call(xw2_hi, xw2_lo, adj_i8, valid_cols=c_dim, tm=tm)

    return out[:n, :c_dim]


def gnn_forward_ref(x, adj, w1, w2):
    """Plain-JAX f32 reference (HIGHEST matmul precision) for checking."""
    h = jnp.maximum(
        jnp.dot(adj, jnp.dot(x, w1, precision=_HIGHEST), precision=_HIGHEST),
        0.0)
    logits = jnp.dot(adj, jnp.dot(h, w2, precision=_HIGHEST), precision=_HIGHEST)
    return jax.nn.log_softmax(logits, axis=1)


# ----------------------------------------------------------------------------
# Main
# ----------------------------------------------------------------------------
if __name__ == "__main__":
    # Small synthetic stand-in for the FacebookPagePage graph:
    #   N nodes (deliberately NOT a multiple of the tile), F features,
    #   H=16 hidden, C classes.
    N, F, H, C = 300, 34, 16, 8

    key = jax.random.PRNGKey(0)
    k_x, k_adj, k_w1, k_w2 = jax.random.split(key, 4)

    x = jax.random.normal(k_x, (N, F), dtype=jnp.float32)

    # Dense 0/1 adjacency with self loops, analogous to to_dense_adj(edge_index)[0].
    a = (jax.random.uniform(k_adj, (N, N)) < 0.05).astype(jnp.float32)
    adj = jnp.clip(a + a.T + jnp.eye(N, dtype=jnp.float32), 0.0, 1.0)

    # Linear(dim_in, dim_out, bias=False) weights, stored as [in, out].
    w1 = jax.random.normal(k_w1, (F, H), dtype=jnp.float32) * (1.0 / jnp.sqrt(F))
    w2 = jax.random.normal(k_w2, (H, C), dtype=jnp.float32) * (1.0 / jnp.sqrt(H))

    fwd = jax.jit(functools.partial(gnn_forward, tm=128))
    out = jax.block_until_ready(fwd(x, adj, w1, w2))

    ref = gnn_forward_ref(x, adj, w1, w2)
    assert out.shape == (N, C)
    # bf16 hi/lo split keeps the kernel ~f32-exact; tolerance covers residual
    # rounding through two aggregation layers and log_softmax.
    assert jnp.allclose(out, ref, atol=5e-3, rtol=5e-3), "mismatch vs reference"

    print("KERNEL_OK")
</pallas_src>

<mosaic_0001>
module attributes {stable_mosaic.version = 11 : i64} {
  func.func @_layer1_kernel(%arg0: i32, %arg1: memref<384x128xbf16, #tpu.memory_space<vmem>>, %arg2: memref<384x128xbf16, #tpu.memory_space<vmem>>, %arg3: memref<128x128xbf16, #tpu.memory_space<vmem>>, %arg4: memref<128x128xbf16, #tpu.memory_space<vmem>>, %arg5: memref<128x384xi8, #tpu.memory_space<vmem>>, %arg6: memref<128x128xbf16, #tpu.memory_space<vmem>>, %arg7: memref<128x128xbf16, #tpu.memory_space<vmem>>) attributes {dimension_semantics = [#tpu.dimension_semantics<parallel>], iteration_bounds = array<i64: 3>, scalar_prefetch = 0 : i64, scratch_operands = 0 : i64, tpu.core_type = #tpu.core_type<tc>, window_params = [{pipeline_mode = #tpu.pipeline_mode<synchronous>, transform_indices = @transform_0, window_bounds = array<i64: 384, 128>}, {pipeline_mode = #tpu.pipeline_mode<synchronous>, transform_indices = @transform_1, window_bounds = array<i64: 384, 128>}, {pipeline_mode = #tpu.pipeline_mode<synchronous>, transform_indices = @transform_2, window_bounds = array<i64: 128, 128>}, {pipeline_mode = #tpu.pipeline_mode<synchronous>, transform_indices = @transform_3, window_bounds = array<i64: 128, 128>}, {transform_indices = @transform_4, window_bounds = array<i64: 128, 384>}, {transform_indices = @transform_5, window_bounds = array<i64: 128, 128>}, {transform_indices = @transform_6, window_bounds = array<i64: 128, 128>}]} {
    %c0 = arith.constant 0 : index
    %c0_0 = arith.constant 0 : index
    %0 = vector.load %arg5[%c0, %c0_0] : memref<128x384xi8, #tpu.memory_space<vmem>>, vector<128x384xi8>
    %1 = arith.sitofp %0 : vector<128x384xi8> to vector<128x384xbf16>
    %c0_1 = arith.constant 0 : index
    %c0_2 = arith.constant 0 : index
    %2 = vector.load %arg1[%c0_1, %c0_2] : memref<384x128xbf16, #tpu.memory_space<vmem>>, vector<384x128xbf16>
    %cst = arith.constant dense<0.000000e+00> : vector<128x128xf32>
    %3 = tpu.matmul %1, %2, %cst {dimension_numbers = #tpu.dot_dimension_numbers<[1], [0], [0], [1], [0, 0, 1, 1], [], []>} : vector<128x384xbf16>, vector<384x128xbf16>, vector<128x128xf32> -> vector<128x128xf32>
    %c0_3 = arith.constant 0 : index
    %c0_4 = arith.constant 0 : index
    %4 = vector.load %arg2[%c0_3, %c0_4] : memref<384x128xbf16, #tpu.memory_space<vmem>>, vector<384x128xbf16>
    %cst_5 = arith.constant dense<0.000000e+00> : vector<128x128xf32>
    %5 = tpu.matmul %1, %4, %cst_5 {dimension_numbers = #tpu.dot_dimension_numbers<[1], [0], [0], [1], [0, 0, 1, 1], [], []>} : vector<128x384xbf16>, vector<384x128xbf16>, vector<128x128xf32> -> vector<128x128xf32>
    %6 = arith.addf %3, %5 : vector<128x128xf32>
    %cst_6 = arith.constant 0.000000e+00 : f32
    %7 = vector.broadcast %cst_6 : f32 to vector<128x128xf32>
    %8 = arith.maximumf %6, %7 : vector<128x128xf32>
    %9 = arith.truncf %8 : vector<128x128xf32> to vector<128x128xbf16>
    %10 = arith.extf %9 : vector<128x128xbf16> to vector<128x128xf32>
    %11 = arith.subf %8, %10 : vector<128x128xf32>
    %12 = arith.truncf %11 : vector<128x128xf32> to vector<128x128xbf16>
    %c0_7 = arith.constant 0 : index
    %c0_8 = arith.constant 0 : index
    %13 = vector.load %arg3[%c0_7, %c0_8] : memref<128x128xbf16, #tpu.memory_space<vmem>>, vector<128x128xbf16>
    %cst_9 = arith.constant dense<0.000000e+00> : vector<128x128xf32>
    %14 = tpu.matmul %9, %13, %cst_9 {dimension_numbers = #tpu.dot_dimension_numbers<[1], [0], [0], [1], [0, 0, 1, 1], [], []>} : vector<128x128xbf16>, vector<128x128xbf16>, vector<128x128xf32> -> vector<128x128xf32>
    %c0_10 = arith.constant 0 : index
    %c0_11 = arith.constant 0 : index
    %15 = vector.load %arg4[%c0_10, %c0_11] : memref<128x128xbf16, #tpu.memory_space<vmem>>, vector<128x128xbf16>
    %cst_12 = arith.constant dense<0.000000e+00> : vector<128x128xf32>
    %16 = tpu.matmul %9, %15, %cst_12 {dimension_numbers = #tpu.dot_dimension_numbers<[1], [0], [0], [1], [0, 0, 1, 1], [], []>} : vector<128x128xbf16>, vector<128x128xbf16>, vector<128x128xf32> -> vector<128x128xf32>
    %17 = arith.addf %14, %16 : vector<128x128xf32>
    %c0_13 = arith.constant 0 : index
    %c0_14 = arith.constant 0 : index
    %18 = vector.load %arg3[%c0_13, %c0_14] : memref<128x128xbf16, #tpu.memory_space<vmem>>, vector<128x128xbf16>
    %cst_15 = arith.constant dense<0.000000e+00> : vector<128x128xf32>
    %19 = tpu.matmul %12, %18, %cst_15 {dimension_numbers = #tpu.dot_dimension_numbers<[1], [0], [0], [1], [0, 0, 1, 1], [], []>} : vector<128x128xbf16>, vector<128x128xbf16>, vector<128x128xf32> -> vector<128x128xf32>
    %20 = arith.addf %17, %19 : vector<128x128xf32>
    %21 = arith.truncf %20 : vector<128x128xf32> to vector<128x128xbf16>
    %22 = arith.extf %21 : vector<128x128xbf16> to vector<128x128xf32>
    %23 = arith.subf %20, %22 : vector<128x128xf32>
    %24 = arith.truncf %23 : vector<128x128xf32> to vector<128x128xbf16>
    %c0_16 = arith.constant 0 : index
    %c0_17 = arith.constant 0 : index
    %25 = vector.load %arg6[%c0_16, %c0_17] : memref<128x128xbf16, #tpu.memory_space<vmem>>, vector<128x128xbf16>
    tpu.vector_store %arg6[%c0_16, %c0_17], %21 {strides = array<i32>} : memref<128x128xbf16, #tpu.memory_space<vmem>>, vector<128x128xbf16>,
    %c0_18 = arith.constant 0 : index
    %c0_19 = arith.constant 0 : index
    %26 = vector.load %arg7[%c0_18, %c0_19] : memref<128x128xbf16, #tpu.memory_space<vmem>>, vector<128x128xbf16>
    tpu.vector_store %arg7[%c0_18, %c0_19], %24 {strides = array<i32>} : memref<128x128xbf16, #tpu.memory_space<vmem>>, vector<128x128xbf16>,
    return
  }
  func.func @transform_0(%arg0: i32) -> (i32, i32) {
    %c0_i32 = arith.constant 0 : i32
    %c0_i32_0 = arith.constant 0 : i32
    %c0_i32_1 = arith.constant 0 : i32
    return %c0_i32, %c0_i32_0 : i32, i32
  }
  func.func @transform_1(%arg0: i32) -> (i32, i32) {
    %c0_i32 = arith.constant 0 : i32
    %c0_i32_0 = arith.constant 0 : i32
    %c0_i32_1 = arith.constant 0 : i32
    return %c0_i32, %c0_i32_0 : i32, i32
  }
  func.func @transform_2(%arg0: i32) -> (i32, i32) {
    %c0_i32 = arith.constant 0 : i32
    %c0_i32_0 = arith.constant 0 : i32
    %c0_i32_1 = arith.constant 0 : i32
    return %c0_i32, %c0_i32_0 : i32, i32
  }
  func.func @transform_3(%arg0: i32) -> (i32, i32) {
    %c0_i32 = arith.constant 0 : i32
    %c0_i32_0 = arith.constant 0 : i32
    %c0_i32_1 = arith.constant 0 : i32
    return %c0_i32, %c0_i32_0 : i32, i32
  }
  func.func @transform_4(%arg0: i32) -> (i32, i32) {
    %c0_i32 = arith.constant 0 : i32
    %c0_i32_0 = arith.constant 0 : i32
    return %arg0, %c0_i32 : i32, i32
  }
  func.func @transform_5(%arg0: i32) -> (i32, i32) {
    %c0_i32 = arith.constant 0 : i32
    %c0_i32_0 = arith.constant 0 : i32
    return %arg0, %c0_i32 : i32, i32
  }
  func.func @transform_6(%arg0: i32) -> (i32, i32) {
    %c0_i32 = arith.constant 0 : i32
    %c0_i32_0 = arith.constant 0 : i32
    return %arg0, %c0_i32 : i32, i32
  }
}

module attributes {stable_mosaic.version = 11 : i64} {
  func.func @_layer2_kernel(%arg0: i32, %arg1: memref<384x128xbf16, #tpu.memory_space<vmem>>, %arg2: memref<384x128xbf16, #tpu.memory_space<vmem>>, %arg3: memref<128x384xi8, #tpu.memory_space<vmem>>, %arg4: memref<128x128xf32, #tpu.memory_space<vmem>>) attributes {dimension_semantics = [#tpu.dimension_semantics<parallel>], iteration_bounds = array<i64: 3>, scalar_prefetch = 0 : i64, scratch_operands = 0 : i64, tpu.core_type = #tpu.core_type<tc>, window_params = [{pipeline_mode = #tpu.pipeline_mode<synchronous>, transform_indices = @transform_0, window_bounds = array<i64: 384, 128>}, {pipeline_mode = #tpu.pipeline_mode<synchronous>, transform_indices = @transform_1, window_bounds = array<i64: 384, 128>}, {transform_indices = @transform_2, window_bounds = array<i64: 128, 384>}, {transform_indices = @transform_3, window_bounds = array<i64: 128, 128>}]} {
    %c0 = arith.constant 0 : index
    %c0_0 = arith.constant 0 : index
    %0 = vector.load %arg3[%c0, %c0_0] : memref<128x384xi8, #tpu.memory_space<vmem>>, vector<128x384xi8>
    %1 = arith.sitofp %0 : vector<128x384xi8> to vector<128x384xbf16>
    %c0_1 = arith.constant 0 : index
    %c0_2 = arith.constant 0 : index
    %2 = vector.load %arg1[%c0_1, %c0_2] : memref<384x128xbf16, #tpu.memory_space<vmem>>, vector<384x128xbf16>
    %cst = arith.constant dense<0.000000e+00> : vector<128x128xf32>
    %3 = tpu.matmul %1, %2, %cst {dimension_numbers = #tpu.dot_dimension_numbers<[1], [0], [0], [1], [0, 0, 1, 1], [], []>} : vector<128x384xbf16>, vector<384x128xbf16>, vector<128x128xf32> -> vector<128x128xf32>
    %c0_3 = arith.constant 0 : index
    %c0_4 = arith.constant 0 : index
    %4 = vector.load %arg2[%c0_3, %c0_4] : memref<384x128xbf16, #tpu.memory_space<vmem>>, vector<384x128xbf16>
    %cst_5 = arith.constant dense<0.000000e+00> : vector<128x128xf32>
    %5 = tpu.matmul %1, %4, %cst_5 {dimension_numbers = #tpu.dot_dimension_numbers<[1], [0], [0], [1], [0, 0, 1, 1], [], []>} : vector<128x384xbf16>, vector<384x128xbf16>, vector<128x128xf32> -> vector<128x128xf32>
    %6 = arith.addf %3, %5 : vector<128x128xf32>
    %7 = tpu.iota {dimensions = array<i32: 1>} : vector<128x128xi32>
    %c8_i32 = arith.constant 8 : i32
    %8 = vector.broadcast %c8_i32 : i32 to vector<128x128xi32>
    %9 = arith.cmpi slt, %7, %8 : vector<128x128xi32>
    %cst_6 = arith.constant -1.000000e+30 : f32
    %10 = vector.broadcast %cst_6 : f32 to vector<128x128xf32>
    %11 = arith.select %9, %6, %10 : vector<128x128xi1>, vector<128x128xf32>
    %cst_7 = arith.constant dense<0xFF800000> : vector<128xf32>
    %12 = vector.multi_reduction <maximumf>, %11, %cst_7 [1] : vector<128x128xf32> to vector<128xf32>
    %13 = vector.shape_cast %12 : vector<128xf32> to vector<128x1xf32>
    %14 = vector.broadcast %13 : vector<128x1xf32> to vector<128x128xf32>
    %15 = arith.subf %11, %14 : vector<128x128xf32>
    %16 = math.exp %15 : vector<128x128xf32>
    %cst_8 = arith.constant dense<0.000000e+00> : vector<128xf32>
    %17 = vector.multi_reduction <add>, %16, %cst_8 [1] : vector<128x128xf32> to vector<128xf32>
    %18 = vector.shape_cast %17 : vector<128xf32> to vector<128x1xf32>
    %19 = math.log %18 : vector<128x1xf32>
    %20 = vector.broadcast %19 : vector<128x1xf32> to vector<128x128xf32>
    %21 = arith.subf %15, %20 : vector<128x128xf32>
    %c0_9 = arith.constant 0 : index
    %c0_10 = arith.constant 0 : index
    %22 = vector.load %arg4[%c0_9, %c0_10] : memref<128x128xf32, #tpu.memory_space<vmem>>, vector<128x128xf32>
    tpu.vector_store %arg4[%c0_9, %c0_10], %21 {strides = array<i32>} : memref<128x128xf32, #tpu.memory_space<vmem>>, vector<128x128xf32>,
    return
  }
  func.func @transform_0(%arg0: i32) -> (i32, i32) {
    %c0_i32 = arith.constant 0 : i32
    %c0_i32_0 = arith.constant 0 : i32
    %c0_i32_1 = arith.constant 0 : i32
    return %c0_i32, %c0_i32_0 : i32, i32
  }
  func.func @transform_1(%arg0: i32) -> (i32, i32) {
    %c0_i32 = arith.constant 0 : i32
    %c0_i32_0 = arith.constant 0 : i32
    %c0_i32_1 = arith.constant 0 : i32
    return %c0_i32, %c0_i32_0 : i32, i32
  }
  func.func @transform_2(%arg0: i32) -> (i32, i32) {
    %c0_i32 = arith.constant 0 : i32
    %c0_i32_0 = arith.constant 0 : i32
    return %arg0, %c0_i32 : i32, i32
  }
  func.func @transform_3(%arg0: i32) -> (i32, i32) {
    %c0_i32 = arith.constant 0 : i32
    %c0_i32_0 = arith.constant 0 : i32
    return %arg0, %c0_i32 : i32, i32
  }
}

</mosaic_0001>

<llo_original>
// kernel: gnn_forward.3
$region0: #{gnn_forward.3}
  #allocation0 [shape = 'u32[]', space=smem, size = 0x4, offset = 0x4, fixed_abs, tag = 'smem constant byte address 0x4 - core index']
  #allocation1 [shape = 'u32[144,128]{1,0:T(1,128)}', space=vmem, size = 0x12000, scoped, tag = 'internal scratch']
  %s0 = inlined_call_operand.vmem [shape: bf16[384,128], index: 0, kind: input, shape index: {}]
  %s1 = inlined_call_operand.vmem [shape: bf16[384,128], index: 1, kind: input, shape index: {}]
  %s2 = inlined_call_operand.vmem [shape: s8[384,384], index: 2, kind: input, shape index: {}]
  %s3 = inlined_call_operand.vmem [shape: f32[384,128], index: 3, kind: output, shape index: {}]
  %s4 = sld [smem:[#allocation0]]
  $region45: #{gnn_forward.3} parent=0
    _
  %s6 = ssub.s32 1, %s4
  %s7 = scalar_select 0, %s6, %s4
  loop: start=0, step=1, limit=5
  $region2: #{gnn_forward.3} parent=0 // loop_pre_header
    _
  $region3: #{gnn_forward.3} parent=0 // loop_header
    %s9 = sphi 0, %s13
    %p10 = scmp.ge.s32.totalorder %s9, 5
    %s17 = sphi 0, %s17
    %s19 = sphi 0, %s17
    %s20 = sphi 0, %s19
    %s34 = sphi 0, %s20
    %s38 = sphi 0, %s38
    %s40 = sphi 0, %s38
    %s41 = sphi 0, %s40
    %s55 = sphi 0, %s41
    %s61 = sphi 0, %s63
    %s64 = sphi 0, %s61
    %s65 = sphi 0, %s64
    %s81 = sphi 0, %s65
    %s87 = sphi 0, %s89
    %s90 = sphi 0, %s87
    %s91 = sphi 0, %s90
    %s107 = sphi 0, %s91
  $region4: #{gnn_forward.3} parent=0 // loop_header_branch
    %12 = sbr.rel (%p10) target = $region8
  $region5: #{gnn_forward.3} parent=0 // loop_body
    %s14 = ssub.s32 %s9, 1
    %s15 = ssub.s32 %s9, 2
    %s16 = sadd.s32 %s9, 1
    %s18 = sadd.s32 %s17, 1
    %p21 = scmp.eq.s32.totalorder %s9, 2
    %p22 = scmp.ne.s32.totalorder %s17, %s19
    %p23 = scmp.eq.s32.totalorder %s9, 0
    %p24 = por %p22, %p23
    %p25 = scmp.ne.s32.totalorder %s17, %s19
    %p26 = scmp.eq.s32.totalorder %s14, 2
    %p27 = por %p25, %p26
    %p28 = scmp.ne.s32.totalorder %s19, %s20
    %p29 = scmp.eq.s32.totalorder %s14, 0
    %p30 = por %p28, %p29
    %p31 = scmp.ne.s32.totalorder %s19, %s20
    %p32 = scmp.eq.s32.totalorder %s15, 2
    %p33 = por %p31, %p32
    %p35 = scmp.ne.s32.totalorder %s20, %s34
    %p36 = scmp.eq.s32.totalorder %s15, 0
    %p37 = por %p35, %p36
    %s39 = sadd.s32 %s38, 1
    %p42 = scmp.eq.s32.totalorder %s9, 2
    %p43 = scmp.ne.s32.totalorder %s38, %s40
    %p44 = scmp.eq.s32.totalorder %s9, 0
    %p45 = por %p43, %p44
    %p46 = scmp.ne.s32.totalorder %s38, %s40
    %p47 = scmp.eq.s32.totalorder %s14, 2
    %p48 = por %p46, %p47
    %p49 = scmp.ne.s32.totalorder %s40, %s41
    %p50 = scmp.eq.s32.totalorder %s14, 0
    %p51 = por %p49, %p50
    %p52 = scmp.ne.s32.totalorder %s40, %s41
    %p53 = scmp.eq.s32.totalorder %s15, 2
    %p54 = por %p52, %p53
    %p56 = scmp.ne.s32.totalorder %s41, %s55
    %p57 = scmp.eq.s32.totalorder %s15, 0
    %p58 = por %p56, %p57
    %s59 = ssub.s32 %s9, %s16
    %p60 = scmp.eq.s32.totalorder %s59, 0
    %s62 = sadd.s32 %s61, 1
    %s63 = scalar_select %p60, %s61, %s62
    %p66 = pneg %p60
    %p67 = scmp.eq.s32.totalorder %s9, 2
    %p68 = por %p66, %p67
    %p69 = scmp.ne.s32.totalorder %s61, %s64
    %p70 = scmp.eq.s32.totalorder %s9, 0
    %p71 = por %p69, %p70
    %p72 = scmp.ne.s32.totalorder %s61, %s64
    %p73 = scmp.eq.s32.totalorder %s14, 2
    %p74 = por %p72, %p73
    %p75 = scmp.ne.s32.totalorder %s64, %s65
    %p76 = scmp.eq.s32.totalorder %s14, 0
    %p77 = por %p75, %p76
    %p78 = scmp.ne.s32.totalorder %s64, %s65
    %p79 = scmp.eq.s32.totalorder %s15, 2
    %p80 = por %p78, %p79
    %p82 = scmp.ne.s32.totalorder %s65, %s81
    %p83 = scmp.eq.s32.totalorder %s15, 0
    %p84 = por %p82, %p83
    %s85 = ssub.s32 %s9, %s16
    %p86 = scmp.eq.s32.totalorder %s85, 0
    %s88 = sadd.s32 %s87, 1
    %s89 = scalar_select %p86, %s87, %s88
    %p92 = pneg %p86
    %p93 = scmp.eq.s32.totalorder %s9, 2
    %p94 = por %p92, %p93
    %p95 = scmp.ne.s32.totalorder %s87, %s90
    %p96 = scmp.eq.s32.totalorder %s9, 0
    %p97 = por %p95, %p96
    %p98 = scmp.ne.s32.totalorder %s87, %s90
    %p99 = scmp.eq.s32.totalorder %s14, 2
    %p100 = por %p98, %p99
    %p101 = scmp.ne.s32.totalorder %s90, %s91
    %p102 = scmp.eq.s32.totalorder %s14, 0
    %p103 = por %p101, %p102
    %p104 = scmp.ne.s32.totalorder %s90, %s91
    %p105 = scmp.eq.s32.totalorder %s15, 2
    %p106 = por %p104, %p105
    %p108 = scmp.ne.s32.totalorder %s91, %s107
    %p109 = scmp.eq.s32.totalorder %s15, 0
    %p110 = por %p108, %p109
    %p111 = scmp.le.s32.totalorder 1, %s9
    %p112 = scmp.lt.s32.totalorder %s9, 4
    %p113 = pnand %p111, %p112
    %p114 = pneg %p113
    // Predicated region
    $region9: #{gnn_forward.3} parent=5 // pred_check
      _
    $region10: #{gnn_forward.3} parent=5 // pred_check_branch
      %116 = sbr.rel (%p113) target = $region12
    $region11: #{gnn_forward.3} parent=5 // pred_region
      %s117 = ssub.s32 %s9, 1
      // Predicated region
      $region13: #{gnn_forward.3} parent=11 // pred_check
        %p118 = pneg %p30
      $region14: #{gnn_forward.3} parent=11 // pred_check_branch
        %120 = sbr.rel (%p118) target = $region16
      $region15: #{gnn_forward.3} parent=11 // pred_region
        _
      $region16: #{gnn_forward.3} parent=11 // pred_fallthru
        _
      // Predicated region
      $region17: #{gnn_forward.3} parent=11 // pred_check
        %p121 = pneg %p51
      $region18: #{gnn_forward.3} parent=11 // pred_check_branch
        %123 = sbr.rel (%p121) target = $region20
      $region19: #{gnn_forward.3} parent=11 // pred_region
        _
      $region20: #{gnn_forward.3} parent=11 // pred_fallthru
        _
    $region12: #{gnn_forward.3} parent=5 // pred_fallthru
      _
    %p124 = scmp.lt.s32.totalorder %s9, 3
    // Predicated region
    $region21: #{gnn_forward.3} parent=5 // pred_check
      %p125 = pneg %p124
    $region22: #{gnn_forward.3} parent=5 // pred_check_branch
      %127 = sbr.rel (%p125) target = $region24
    $region23: #{gnn_forward.3} parent=5 // pred_region
      // Predicated region
      $region25: #{gnn_forward.3} parent=23 // pred_check
        %p128 = pneg %p71
      $region26: #{gnn_forward.3} parent=23 // pred_check_branch
        %130 = sbr.rel (%p128) target = $region28
      $region27: #{gnn_forward.3} parent=23 // pred_region
        %s131 = smul.u32 4, %s9
        %p132 = scmp.lt.s32.totalorder %s131, 11
        %s133 = scalar_select %p132, %s131, 11
        %s134 = smul.addr %s133, 3
        %s135 = smul.addr %s134, 8
        %s136 = scalar_lea.vmem %s2, %s135
        %s137 = smul.u32 4, %s9
      $region28: #{gnn_forward.3} parent=23 // pred_fallthru
        _
    $region24: #{gnn_forward.3} parent=5 // pred_fallthru
      _
    %p138 = scmp.le.s32.totalorder 1, %s9
    %p139 = scmp.lt.s32.totalorder %s9, 4
    %p140 = pnand %p138, %p139
    %p141 = pneg %p140
    // Predicated region
    $region29: #{gnn_forward.3} parent=5 // pred_check
      _
    $region30: #{gnn_forward.3} parent=5 // pred_check_branch
      %143 = sbr.rel (%p140) target = $region32
    $region31: #{gnn_forward.3} parent=5 // pred_region
      %s144 = ssub.s32 %s9, 1
      %p145 = pneg %p30
      %p146 = pneg %p27
      %p147 = pneg %p51
      %p148 = pneg %p48
      %s149 = smul.u32 4, %s14
      %p150 = scmp.lt.s32.totalorder %s149, 11
      %s151 = scalar_select %p150, %s149, 11
      %s152 = smul.addr %s151, 3
      %s153 = smul.addr %s152, 8
      %s154 = scalar_lea.vmem %s2, %s153
      %p155 = pneg %p77
      %p156 = pneg %p74
      %p157 = pneg %p103
      %p158 = pneg %p100
      %s159 = smul.u32 16, %s14
      %p160 = scmp.lt.s32.totalorder %s159, 47
      %s161 = scalar_select %p160, %s159, 47
      %s162 = smul.addr %s161, 8
      %s163 = scalar_lea.vmem %s3, %s162
      %s164 = smul.u32 4, %s14
      %p165 = scmp.lt.s32.totalorder %s164, 11
      %s166 = scalar_select %p165, %s164, 11
      %s167 = smul.addr %s166, 3
      %s168 = smul.addr %s167, 8
      %s169 = scalar_lea.vmem %s2, %s168
      %s170 = smul.u32 4, %s14
      %s171 = smul.u32 16, %s14
      %p172 = scmp.lt.s32.totalorder %s171, 47
      %s173 = scalar_select %p172, %s171, 47
      %s174 = smul.addr %s173, 8
      %s175 = scalar_lea.vmem %s3, %s174
      %s176 = smul.u32 16, %s14
      %v178 = vld [vmem:[%s169] sm:$0xff]
      %v179 = vld [vmem:[%s169 + $0x8] sm:$0xff]
      %v180 = vld [vmem:[%s169 + $0x10] sm:$0xff]
      %v181 = vld [vmem:[%s169 + $0x18] sm:$0xff]
      %v182 = vld [vmem:[%s169 + $0x20] sm:$0xff]
      %v183 = vld [vmem:[%s169 + $0x28] sm:$0xff]
      %v184 = vld [vmem:[%s169 + $0x30] sm:$0xff]
      %v185 = vld [vmem:[%s169 + $0x38] sm:$0xff]
      %v186 = vld [vmem:[%s169 + $0x40] sm:$0xff]
      %v187 = vld [vmem:[%s169 + $0x48] sm:$0xff]
      %v188 = vld [vmem:[%s169 + $0x50] sm:$0xff]
      %v189 = vld [vmem:[%s169 + $0x58] sm:$0xff]
      %v190 = vunpack.c.l.s8.bf16 %v178
      %v191 = vunpack.c.l.s8.bf16 %v179
      %v192 = vunpack.c.l.s8.bf16 %v180
      %v193 = vunpack.c.h.s8.bf16 %v178
      %v194 = vunpack.c.h.s8.bf16 %v179
      %v195 = vunpack.c.h.s8.bf16 %v180
      %v196 = vunpack.c.l.s8.bf16 %v181
      %v197 = vunpack.c.l.s8.bf16 %v182
      %v198 = vunpack.c.l.s8.bf16 %v183
      %v199 = vunpack.c.h.s8.bf16 %v181
      %v200 = vunpack.c.h.s8.bf16 %v182
      %v201 = vunpack.c.h.s8.bf16 %v183
      %v202 = vunpack.c.l.s8.bf16 %v184
      %v203 = vunpack.c.l.s8.bf16 %v185
      %v204 = vunpack.c.l.s8.bf16 %v186
      %v205 = vunpack.c.h.s8.bf16 %v184
      %v206 = vunpack.c.h.s8.bf16 %v185
      %v207 = vunpack.c.h.s8.bf16 %v186
      %v208 = vunpack.c.l.s8.bf16 %v187
      %v209 = vunpack.c.l.s8.bf16 %v188
      %v210 = vunpack.c.l.s8.bf16 %v189
      %v211 = vunpack.c.h.s8.bf16 %v187
      %v212 = vunpack.c.h.s8.bf16 %v188
      %v213 = vunpack.c.h.s8.bf16 %v189
      %v214 = vld [vmem:[%s0] sm:$0xf]
      %v215 = vld [vmem:[%s0 + $0x4] sm:$0xf]
      %v216 = vld [vmem:[%s0 + $0x8] sm:$0xf]
      %v217 = vld [vmem:[%s0 + $0xc] sm:$0xf]
      %v218 = vld [vmem:[%s0 + $0x10] sm:$0xf]
      %v219 = vld [vmem:[%s0 + $0x14] sm:$0xf]
      %v220 = vld [vmem:[%s0 + $0x18] sm:$0xf]
      %v221 = vld [vmem:[%s0 + $0x1c] sm:$0xf]
      %v222 = vld [vmem:[%s0 + $0x20] sm:$0xf]
      %v223 = vld [vmem:[%s0 + $0x24] sm:$0xf]
      %v224 = vld [vmem:[%s0 + $0x28] sm:$0xf]
      %v225 = vld [vmem:[%s0 + $0x2c] sm:$0xf]
      %v226 = vld [vmem:[%s0 + $0x30] sm:$0xf]
      %v227 = vld [vmem:[%s0 + $0x34] sm:$0xf]
      %v228 = vld [vmem:[%s0 + $0x38] sm:$0xf]
      %v229 = vld [vmem:[%s0 + $0x3c] sm:$0xf]
      %v230 = vld [vmem:[%s0 + $0x40] sm:$0xf]
      %v231 = vld [vmem:[%s0 + $0x44] sm:$0xf]
      %v232 = vld [vmem:[%s0 + $0x48] sm:$0xf]
      %v233 = vld [vmem:[%s0 + $0x4c] sm:$0xf]
      %v234 = vld [vmem:[%s0 + $0x50] sm:$0xf]
      %v235 = vld [vmem:[%s0 + $0x54] sm:$0xf]
      %v236 = vld [vmem:[%s0 + $0x58] sm:$0xf]
      %v237 = vld [vmem:[%s0 + $0x5c] sm:$0xf]
      %v238 = vld [vmem:[%s0 + $0x60] sm:$0xf]
      %v239 = vld [vmem:[%s0 + $0x64] sm:$0xf]
      %v240 = vld [vmem:[%s0 + $0x68] sm:$0xf]
      %v241 = vld [vmem:[%s0 + $0x6c] sm:$0xf]
      %v242 = vld [vmem:[%s0 + $0x70] sm:$0xf]
      %v243 = vld [vmem:[%s0 + $0x74] sm:$0xf]
      %v244 = vld [vmem:[%s0 + $0x78] sm:$0xf]
      %v245 = vld [vmem:[%s0 + $0x7c] sm:$0xf]
      %v246 = vld [vmem:[%s0 + $0x80] sm:$0xf]
      %v247 = vld [vmem:[%s0 + $0x84] sm:$0xf]
      %v248 = vld [vmem:[%s0 + $0x88] sm:$0xf]
      %v249 = vld [vmem:[%s0 + $0x8c] sm:$0xf]
      %v250 = vld [vmem:[%s0 + $0x90] sm:$0xf]
      %v251 = vld [vmem:[%s0 + $0x94] sm:$0xf]
      %v252 = vld [vmem:[%s0 + $0x98] sm:$0xf]
      %v253 = vld [vmem:[%s0 + $0x9c] sm:$0xf]
      %v254 = vld [vmem:[%s0 + $0xa0] sm:$0xf]
      %v255 = vld [vmem:[%s0 + $0xa4] sm:$0xf]
      %v256 = vld [vmem:[%s0 + $0xa8] sm:$0xf]
      %v257 = vld [vmem:[%s0 + $0xac] sm:$0xf]
      %v258 = vld [vmem:[%s0 + $0xb0] sm:$0xf]
      %v259 = vld [vmem:[%s0 + $0xb4] sm:$0xf]
      %v260 = vld [vmem:[%s0 + $0xb8] sm:$0xf]
      %v261 = vld [vmem:[%s0 + $0xbc] sm:$0xf]
      %v262 = vld [vmem:[%s1] sm:$0xf]
      %v263 = vld [vmem:[%s1 + $0x4] sm:$0xf]
      %v264 = vld [vmem:[%s1 + $0x8] sm:$0xf]
      %v265 = vld [vmem:[%s1 + $0xc] sm:$0xf]
      %v266 = vld [vmem:[%s1 + $0x10] sm:$0xf]
      %v267 = vld [vmem:[%s1 + $0x14] sm:$0xf]
      %v268 = vld [vmem:[%s1 + $0x18] sm:$0xf]
      %v269 = vld [vmem:[%s1 + $0x1c] sm:$0xf]
      %v270 = vld [vmem:[%s1 + $0x20] sm:$0xf]
      %v271 = vld [vmem:[%s1 + $0x24] sm:$0xf]
      %v272 = vld [vmem:[%s1 + $0x28] sm:$0xf]
      %v273 = vld [vmem:[%s1 + $0x2c] sm:$0xf]
      %v274 = vld [vmem:[%s1 + $0x30] sm:$0xf]
      %v275 = vld [vmem:[%s1 + $0x34] sm:$0xf]
      %v276 = vld [vmem:[%s1 + $0x38] sm:$0xf]
      %v277 = vld [vmem:[%s1 + $0x3c] sm:$0xf]
      %v278 = vld [vmem:[%s1 + $0x40] sm:$0xf]
      %v279 = vld [vmem:[%s1 + $0x44] sm:$0xf]
      %v280 = vld [vmem:[%s1 + $0x48] sm:$0xf]
      %v281 = vld [vmem:[%s1 + $0x4c] sm:$0xf]
      %v282 = vld [vmem:[%s1 + $0x50] sm:$0xf]
      %v283 = vld [vmem:[%s1 + $0x54] sm:$0xf]
      %v284 = vld [vmem:[%s1 + $0x58] sm:$0xf]
      %v285 = vld [vmem:[%s1 + $0x5c] sm:$0xf]
      %v286 = vld [vmem:[%s1 + $0x60] sm:$0xf]
      %v287 = vld [vmem:[%s1 + $0x64] sm:$0xf]
      %v288 = vld [vmem:[%s1 + $0x68] sm:$0xf]
      %v289 = vld [vmem:[%s1 + $0x6c] sm:$0xf]
      %v290 = vld [vmem:[%s1 + $0x70] sm:$0xf]
      %v291 = vld [vmem:[%s1 + $0x74] sm:$0xf]
      %v292 = vld [vmem:[%s1 + $0x78] sm:$0xf]
      %v293 = vld [vmem:[%s1 + $0x7c] sm:$0xf]
      %v294 = vld [vmem:[%s1 + $0x80] sm:$0xf]
      %v295 = vld [vmem:[%s1 + $0x84] sm:$0xf]
      %v296 = vld [vmem:[%s1 + $0x88] sm:$0xf]
      %v297 = vld [vmem:[%s1 + $0x8c] sm:$0xf]
      %v298 = vld [vmem:[%s1 + $0x90] sm:$0xf]
      %v299 = vld [vmem:[%s1 + $0x94] sm:$0xf]
      %v300 = vld [vmem:[%s1 + $0x98] sm:$0xf]
      %v301 = vld [vmem:[%s1 + $0x9c] sm:$0xf]
      %v302 = vld [vmem:[%s1 + $0xa0] sm:$0xf]
      %v303 = vld [vmem:[%s1 + $0xa4] sm:$0xf]
      %v304 = vld [vmem:[%s1 + $0xa8] sm:$0xf]
      %v305 = vld [vmem:[%s1 + $0xac] sm:$0xf]
      %v306 = vld [vmem:[%s1 + $0xb0] sm:$0xf]
      %v307 = vld [vmem:[%s1 + $0xb4] sm:$0xf]
      %v308 = vld [vmem:[%s1 + $0xb8] sm:$0xf]
      %v309 = vld [vmem:[%s1 + $0xbc] sm:$0xf]
      %v358 = vunpack.c.l.b16 %v262
      %v359 = vunpack.c.l.b16 %v263
      %v360 = vunpack.c.l.b16 %v264
      %v361 = vunpack.c.l.b16 %v265
      %v362 = vunpack.c.l.b16 %v266
      %v363 = vunpack.c.l.b16 %v267
      %v364 = vunpack.c.l.b16 %v268
      %v365 = vunpack.c.l.b16 %v269
      %v366 = vunpack.c.l.b16 %v270
      %v367 = vunpack.c.l.b16 %v271
      %v368 = vunpack.c.l.b16 %v272
      %v369 = vunpack.c.l.b16 %v273
      %v370 = vunpack.c.l.b16 %v274
      %v371 = vunpack.c.l.b16 %v275
      %v372 = vunpack.c.l.b16 %v276
      %v373 = vunpack.c.l.b16 %v277
      %v374 = vunpack.c.l.b16 %v278
      %v375 = vunpack.c.l.b16 %v279
      %v376 = vunpack.c.l.b16 %v280
      %v377 = vunpack.c.l.b16 %v281
      %v378 = vunpack.c.l.b16 %v282
      %v379 = vunpack.c.l.b16 %v283
      %v380 = vunpack.c.l.b16 %v284
      %v381 = vunpack.c.l.b16 %v285
      %v382 = vunpack.c.l.b16 %v286
      %v383 = vunpack.c.l.b16 %v287
      %v384 = vunpack.c.l.b16 %v288
      %v385 = vunpack.c.l.b16 %v289
      %v386 = vunpack.c.l.b16 %v290
      %v387 = vunpack.c.l.b16 %v291
      %v388 = vunpack.c.l.b16 %v292
      %v389 = vunpack.c.l.b16 %v293
      %v390 = vunpack.c.l.b16 %v294
      %v391 = vunpack.c.l.b16 %v295
      %v392 = vunpack.c.l.b16 %v296
      %v393 = vunpack.c.l.b16 %v297
      %v394 = vunpack.c.l.b16 %v298
      %v395 = vunpack.c.l.b16 %v299
      %v396 = vunpack.c.l.b16 %v300
      %v397 = vunpack.c.l.b16 %v301
      %v398 = vunpack.c.l.b16 %v302
      %v399 = vunpack.c.l.b16 %v303
      %v400 = vunpack.c.l.b16 %v304
      %v401 = vunpack.c.l.b16 %v305
      %v402 = vunpack.c.l.b16 %v306
      %v403 = vunpack.c.l.b16 %v307
      %v404 = vunpack.c.l.b16 %v308
      %v405 = vunpack.c.l.b16 %v309
      %v406 = vpack.c.b16 %v359, %v358
      %v407 = vpack.c.b16 %v361, %v360
      %v408 = vpack.c.b16 %v363, %v362
      %v409 = vpack.c.b16 %v365, %v364
      %v410 = vpack.c.b16 %v367, %v366
      %v411 = vpack.c.b16 %v369, %v368
      %v412 = vpack.c.b16 %v371, %v370
      %v413 = vpack.c.b16 %v373, %v372
      %v414 = vpack.c.b16 %v375, %v374
      %v415 = vpack.c.b16 %v377, %v376
      %v416 = vpack.c.b16 %v379, %v378
      %v417 = vpack.c.b16 %v381, %v380
      %v418 = vpack.c.b16 %v383, %v382
      %v419 = vpack.c.b16 %v385, %v384
      %v420 = vpack.c.b16 %v387, %v386
      %v421 = vpack.c.b16 %v389, %v388
      %v422 = vpack.c.b16 %v391, %v390
      %v423 = vpack.c.b16 %v393, %v392
      %v424 = vpack.c.b16 %v395, %v394
      %v425 = vpack.c.b16 %v397, %v396
      %v426 = vpack.c.b16 %v399, %v398
      %v427 = vpack.c.b16 %v401, %v400
      %v428 = vpack.c.b16 %v403, %v402
      %v429 = vpack.c.b16 %v405, %v404
      %454 = vmatprep.subr.bf16.mxu0 0
      %455 = vmatpush1.bf16.msra.mxu0 %v413
      %456 = vmatprep.subr.bf16.mxu0 0
      %457 = vmatpush1.bf16.msra.mxu0 %v412
      %458 = vmatprep.subr.bf16.mxu0 0
      %459 = vmatpush1.bf16.msra.mxu0 %v411
      %460 = vmatprep.subr.bf16.mxu0 0
      %461 = vmatpush1.bf16.msra.mxu0 %v410
      %462 = vmatprep.subr.bf16.mxu0 0
      %463 = vmatpush1.bf16.msra.mxu0 %v409
      %464 = vmatprep.subr.bf16.mxu0 0
      %465 = vmatpush1.bf16.msra.mxu0 %v408
      %466 = vmatprep.subr.bf16.mxu0 0
      %467 = vmatpush1.bf16.msra.mxu0 %v407
      %468 = vmatprep.subr.bf16.mxu0 0
      %469 = vmatpush1.bf16.msra.mxu0 %v406
      %470 = vmatprep.subr.bf16.mxu0 0
      %471 = vmatpush2.bf16.msra.mxu0 %v421
      %472 = vmatprep.subr.bf16.mxu0 0
      %473 = vmatpush2.bf16.msra.mxu0 %v420
      %474 = vmatprep.subr.bf16.mxu0 0
      %475 = vmatpush2.bf16.msra.mxu0 %v419
      %476 = vmatprep.subr.bf16.mxu0 0
      %477 = vmatpush2.bf16.msra.mxu0 %v418
      %478 = vmatprep.subr.bf16.mxu0 0
      %479 = vmatpush2.bf16.msra.mxu0 %v417
      %480 = vmatprep.subr.bf16.mxu0 0
      %481 = vmatpush2.bf16.msra.mxu0 %v416
      %482 = vmatprep.subr.bf16.mxu0 0
      %483 = vmatpush2.bf16.msra.mxu0 %v415
      %484 = vmatprep.subr.bf16.mxu0 0
      %485 = vmatpush2.bf16.msra.mxu0 %v414
      %486 = vmatprep.mubr.bf16.mxu0 %v191
      %487 = vmatmul.mubr.bf16.gmra.mxu0 %v190
      %v488 = vpop.f32.mrf.mxu0
      %v489 = vadd.f32 0.0, %v488
      %v490 = vpop.f32.mrf.mxu0
      %v491 = vpop.f32.mrf.mxu0
      %v492 = vadd.f32 0.0, %v491
      %v493 = vpop.f32.mrf.mxu0
      %494 = vmatprep.mubr.bf16.mxu0 %v194
      %495 = vmatmul.mubr.bf16.gmra.mxu0 %v193
      %v496 = vpop.f32.mrf.mxu0
      %v497 = vadd.f32 0.0, %v496
      %v498 = vpop.f32.mrf.mxu0
      %v499 = vpop.f32.mrf.mxu0
      %v500 = vadd.f32 0.0, %v499
      %v501 = vpop.f32.mrf.mxu0
      %502 = vmatprep.mubr.bf16.mxu0 %v197
      %503 = vmatmul.mubr.bf16.gmra.mxu0 %v196
      %v504 = vpop.f32.mrf.mxu0
      %v505 = vadd.f32 0.0, %v504
      %v506 = vpop.f32.mrf.mxu0
      %v507 = vpop.f32.mrf.mxu0
      %v508 = vadd.f32 0.0, %v507
      %v509 = vpop.f32.mrf.mxu0
      %510 = vmatprep.mubr.bf16.mxu0 %v200
      %511 = vmatmul.mubr.bf16.gmra.mxu0 %v199
      %v512 = vpop.f32.mrf.mxu0
      %v513 = vadd.f32 0.0, %v512
      %v514 = vpop.f32.mrf.mxu0
      %v515 = vpop.f32.mrf.mxu0
      %v516 = vadd.f32 0.0, %v515
      %v517 = vpop.f32.mrf.mxu0
      %518 = vmatprep.mubr.bf16.mxu0 %v203
      %519 = vmatmul.mubr.bf16.gmra.mxu0 %v202
      %v520 = vpop.f32.mrf.mxu0
      %v521 = vadd.f32 0.0, %v520
      %v522 = vpop.f32.mrf.mxu0
      %v523 = vpop.f32.mrf.mxu0
      %v524 = vadd.f32 0.0, %v523
      %v525 = vpop.f32.mrf.mxu0
      %526 = vmatprep.mubr.bf16.mxu0 %v206
      %527 = vmatmul.mubr.bf16.gmra.mxu0 %v205
      %v528 = vpop.f32.mrf.mxu0
      %v529 = vadd.f32 0.0, %v528
      %v530 = vpop.f32.mrf.mxu0
      %v531 = vpop.f32.mrf.mxu0
      %v532 = vadd.f32 0.0, %v531
      %v533 = vpop.f32.mrf.mxu0
      %534 = vmatprep.mubr.bf16.mxu0 %v209
      %535 = vmatmul.mubr.bf16.gmra.mxu0 %v208
      %v536 = vpop.f32.mrf.mxu0
      %v537 = vadd.f32 0.0, %v536
      %v538 = vpop.f32.mrf.mxu0
      %v539 = vpop.f32.mrf.mxu0
      %v540 = vadd.f32 0.0, %v539
      %v541 = vpop.f32.mrf.mxu0
      %542 = vmatprep.mubr.bf16.mxu0 %v212
      %543 = vmatmul.mubr.bf16.gmra.mxu0 %v211
      %v544 = vpop.f32.mrf.mxu0
      %v545 = vadd.f32 0.0, %v544
      %v546 = vpop.f32.mrf.mxu0
      %v547 = vpop.f32.mrf.mxu0
      %v548 = vadd.f32 0.0, %v547
      %v549 = vpop.f32.mrf.mxu0
      %550 = vdwg.mxu0
      %551 = vmatprep.subr.bf16.mxu0 0
      %552 = vmatpush1.bf16.msra.mxu0 %v429
      %553 = vmatprep.subr.bf16.mxu0 0
      %554 = vmatpush1.bf16.msra.mxu0 %v428
      %555 = vmatprep.subr.bf16.mxu0 0
      %556 = vmatpush1.bf16.msra.mxu0 %v427
      %557 = vmatprep.subr.bf16.mxu0 0
      %558 = vmatpush1.bf16.msra.mxu0 %v426
      %559 = vmatprep.subr.bf16.mxu0 0
      %560 = vmatpush1.bf16.msra.mxu0 %v425
      %561 = vmatprep.subr.bf16.mxu0 0
      %562 = vmatpush1.bf16.msra.mxu0 %v424
      %563 = vmatprep.subr.bf16.mxu0 0
      %564 = vmatpush1.bf16.msra.mxu0 %v423
      %565 = vmatprep.subr.bf16.mxu0 0
      %566 = vmatpush1.bf16.msra.mxu0 %v422
      %567 = vmatprep.subr.bf16.mxu0 0
      %568 = vmatpush2.bf16.msra.mxu0 0
      %569 = vmatprep.subr.bf16.mxu0 0
      %570 = vmatpush2.bf16.msra.mxu0 0
      %571 = vmatprep.subr.bf16.mxu0 0
      %572 = vmatpush2.bf16.msra.mxu0 0
      %573 = vmatprep.subr.bf16.mxu0 0
      %574 = vmatpush2.bf16.msra.mxu0 0
      %575 = vmatprep.subr.bf16.mxu0 0
      %576 = vmatpush2.bf16.msra.mxu0 0
      %577 = vmatprep.subr.bf16.mxu0 0
      %578 = vmatpush2.bf16.msra.mxu0 0
      %579 = vmatprep.subr.bf16.mxu0 0
      %580 = vmatpush2.bf16.msra.mxu0 0
      %581 = vmatprep.subr.bf16.mxu0 0
      %582 = vmatpush2.bf16.msra.mxu0 0
      %583 = vmatprep.mubr.bf16.mxu0 0
      %584 = vmatmul.mubr.bf16.gmra.mxu0 %v192
      %v585 = vpop.f32.mrf.mxu0
      %v586 = vadd.f32 %v489, %v585
      %v587 = vpop.f32.mrf.mxu0
      %v588 = vpop.f32.mrf.mxu0
      %v589 = vadd.f32 %v492, %v588
      %v590 = vpop.f32.mrf.mxu0
      %591 = vmatprep.mubr.bf16.mxu0 0
      %592 = vmatmul.mubr.bf16.gmra.mxu0 %v195
      %v593 = vpop.f32.mrf.mxu0
      %v594 = vadd.f32 %v497, %v593
      %v595 = vpop.f32.mrf.mxu0
      %v596 = vpop.f32.mrf.mxu0
      %v597 = vadd.f32 %v500, %v596
      %v598 = vpop.f32.mrf.mxu0
      %599 = vmatprep.mubr.bf16.mxu0 0
      %600 = vmatmul.mubr.bf16.gmra.mxu0 %v198
      %v601 = vpop.f32.mrf.mxu0
      %v602 = vadd.f32 %v505, %v601
      %v603 = vpop.f32.mrf.mxu0
      %v604 = vpop.f32.mrf.mxu0
      %v605 = vadd.f32 %v508, %v604
      %v606 = vpop.f32.mrf.mxu0
      %607 = vmatprep.mubr.bf16.mxu0 0
      %608 = vmatmul.mubr.bf16.gmra.mxu0 %v201
      %v609 = vpop.f32.mrf.mxu0
      %v610 = vadd.f32 %v513, %v609
      %v611 = vpop.f32.mrf.mxu0
      %v612 = vpop.f32.mrf.mxu0
      %v613 = vadd.f32 %v516, %v612
      %v614 = vpop.f32.mrf.mxu0
      %615 = vmatprep.mubr.bf16.mxu0 0
      %616 = vmatmul.mubr.bf16.gmra.mxu0 %v204
      %v617 = vpop.f32.mrf.mxu0
      %v618 = vadd.f32 %v521, %v617
      %v619 = vpop.f32.mrf.mxu0
      %v620 = vpop.f32.mrf.mxu0
      %v621 = vadd.f32 %v524, %v620
      %v622 = vpop.f32.mrf.mxu0
      %623 = vmatprep.mubr.bf16.mxu0 0
      %624 = vmatmul.mubr.bf16.gmra.mxu0 %v207
      %v625 = vpop.f32.mrf.mxu0
      %v626 = vadd.f32 %v529, %v625
      %v627 = vpop.f32.mrf.mxu0
      %v628 = vpop.f32.mrf.mxu0
      %v629 = vadd.f32 %v532, %v628
      %v630 = vpop.f32.mrf.mxu0
      %631 = vmatprep.mubr.bf16.mxu0 0
      %632 = vmatmul.mubr.bf16.gmra.mxu0 %v210
      %v633 = vpop.f32.mrf.mxu0
      %v634 = vadd.f32 %v537, %v633
      %v635 = vpop.f32.mrf.mxu0
      %v636 = vpop.f32.mrf.mxu0
      %v637 = vadd.f32 %v540, %v636
      %v638 = vpop.f32.mrf.mxu0
      %639 = vmatprep.mubr.bf16.mxu0 0
      %640 = vmatmul.mubr.bf16.gmra.mxu0 %v213
      %v641 = vpop.f32.mrf.mxu0
      %v642 = vadd.f32 %v545, %v641
      %v643 = vpop.f32.mrf.mxu0
      %v644 = vpop.f32.mrf.mxu0
      %v645 = vadd.f32 %v548, %v644
      %v646 = vpop.f32.mrf.mxu0
      %647 = vdwg.mxu0
      %v696 = vunpack.c.l.b16 %v214
      %v697 = vunpack.c.l.b16 %v215
      %v698 = vunpack.c.l.b16 %v216
      %v699 = vunpack.c.l.b16 %v217
      %v700 = vunpack.c.l.b16 %v218
      %v701 = vunpack.c.l.b16 %v219
      %v702 = vunpack.c.l.b16 %v220
      %v703 = vunpack.c.l.b16 %v221
      %v704 = vunpack.c.l.b16 %v222
      %v705 = vunpack.c.l.b16 %v223
      %v706 = vunpack.c.l.b16 %v224
      %v707 = vunpack.c.l.b16 %v225
      %v708 = vunpack.c.l.b16 %v226
      %v709 = vunpack.c.l.b16 %v227
      %v710 = vunpack.c.l.b16 %v228
      %v711 = vunpack.c.l.b16 %v229
      %v712 = vunpack.c.l.b16 %v230
      %v713 = vunpack.c.l.b16 %v231
      %v714 = vunpack.c.l.b16 %v232
      %v715 = vunpack.c.l.b16 %v233
      %v716 = vunpack.c.l.b16 %v234
      %v717 = vunpack.c.l.b16 %v235
      %v718 = vunpack.c.l.b16 %v236
      %v719 = vunpack.c.l.b16 %v237
      %v720 = vunpack.c.l.b16 %v238
      %v721 = vunpack.c.l.b16 %v239
      %v722 = vunpack.c.l.b16 %v240
      %v723 = vunpack.c.l.b16 %v241
      %v724 = vunpack.c.l.b16 %v242
      %v725 = vunpack.c.l.b16 %v243
      %v726 = vunpack.c.l.b16 %v244
      %v727 = vunpack.c.l.b16 %v245
      %v728 = vunpack.c.l.b16 %v246
      %v729 = vunpack.c.l.b16 %v247
      %v730 = vunpack.c.l.b16 %v248
      %v731 = vunpack.c.l.b16 %v249
      %v732 = vunpack.c.l.b16 %v250
      %v733 = vunpack.c.l.b16 %v251
      %v734 = vunpack.c.l.b16 %v252
      %v735 = vunpack.c.l.b16 %v253
      %v736 = vunpack.c.l.b16 %v254
      %v737 = vunpack.c.l.b16 %v255
      %v738 = vunpack.c.l.b16 %v256
      %v739 = vunpack.c.l.b16 %v257
      %v740 = vunpack.c.l.b16 %v258
      %v741 = vunpack.c.l.b16 %v259
      %v742 = vunpack.c.l.b16 %v260
      %v743 = vunpack.c.l.b16 %v261
      %v744 = vpack.c.b16 %v697, %v696
      %v745 = vpack.c.b16 %v699, %v698
      %v746 = vpack.c.b16 %v701, %v700
      %v747 = vpack.c.b16 %v703, %v702
      %v748 = vpack.c.b16 %v705, %v704
      %v749 = vpack.c.b16 %v707, %v706
      %v750 = vpack.c.b16 %v709, %v708
      %v751 = vpack.c.b16 %v711, %v710
      %v752 = vpack.c.b16 %v713, %v712
      %v753 = vpack.c.b16 %v715, %v714
      %v754 = vpack.c.b16 %v717, %v716
      %v755 = vpack.c.b16 %v719, %v718
      %v756 = vpack.c.b16 %v721, %v720
      %v757 = vpack.c.b16 %v723, %v722
      %v758 = vpack.c.b16 %v725, %v724
      %v759 = vpack.c.b16 %v727, %v726
      %v760 = vpack.c.b16 %v729, %v728
      %v761 = vpack.c.b16 %v731, %v730
      %v762 = vpack.c.b16 %v733, %v732
      %v763 = vpack.c.b16 %v735, %v734
      %v764 = vpack.c.b16 %v737, %v736
      %v765 = vpack.c.b16 %v739, %v738
      %v766 = vpack.c.b16 %v741, %v740
      %v767 = vpack.c.b16 %v743, %v742
      %792 = vmatprep.subr.bf16.mxu0 0
      %793 = vmatpush1.bf16.msra.mxu0 %v751
      %794 = vmatprep.subr.bf16.mxu0 0
      %795 = vmatpush1.bf16.msra.mxu0 %v750
      %796 = vmatprep.subr.bf16.mxu0 0
      %797 = vmatpush1.bf16.msra.mxu0 %v749
      %798 = vmatprep.subr.bf16.mxu0 0
      %799 = vmatpush1.bf16.msra.mxu0 %v748
      %800 = vmatprep.subr.bf16.mxu0 0
      %801 = vmatpush1.bf16.msra.mxu0 %v747
      %802 = vmatprep.subr.bf16.mxu0 0
      %803 = vmatpush1.bf16.msra.mxu0 %v746
      %804 = vmatprep.subr.bf16.mxu0 0
      %805 = vmatpush1.bf16.msra.mxu0 %v745
      %806 = vmatprep.subr.bf16.mxu0 0
      %807 = vmatpush1.bf16.msra.mxu0 %v744
      %808 = vmatprep.subr.bf16.mxu0 0
      %809 = vmatpush2.bf16.msra.mxu0 %v759
      %810 = vmatprep.subr.bf16.mxu0 0
      %811 = vmatpush2.bf16.msra.mxu0 %v758
      %812 = vmatprep.subr.bf16.mxu0 0
      %813 = vmatpush2.bf16.msra.mxu0 %v757
      %814 = vmatprep.subr.bf16.mxu0 0
      %815 = vmatpush2.bf16.msra.mxu0 %v756
      %816 = vmatprep.subr.bf16.mxu0 0
      %817 = vmatpush2.bf16.msra.mxu0 %v755
      %818 = vmatprep.subr.bf16.mxu0 0
      %819 = vmatpush2.bf16.msra.mxu0 %v754
      %820 = vmatprep.subr.bf16.mxu0 0
      %821 = vmatpush2.bf16.msra.mxu0 %v753
      %822 = vmatprep.subr.bf16.mxu0 0
      %823 = vmatpush2.bf16.msra.mxu0 %v752
      %824 = vmatprep.mubr.bf16.mxu0 %v191
      %825 = vmatmul.mubr.bf16.gmra.mxu0 %v190
      %v826 = vpop.f32.mrf.mxu0
      %v827 = vadd.f32 %v586, %v826
      %v828 = vpop.f32.mrf.mxu0
      %v829 = vpop.f32.mrf.mxu0
      %v830 = vadd.f32 %v589, %v829
      %v831 = vpop.f32.mrf.mxu0
      %832 = vmatprep.mubr.bf16.mxu0 %v194
      %833 = vmatmul.mubr.bf16.gmra.mxu0 %v193
      %v834 = vpop.f32.mrf.mxu0
      %v835 = vadd.f32 %v594, %v834
      %v836 = vpop.f32.mrf.mxu0
      %v837 = vpop.f32.mrf.mxu0
      %v838 = vadd.f32 %v597, %v837
      %v839 = vpop.f32.mrf.mxu0
      %840 = vmatprep.mubr.bf16.mxu0 %v197
      %841 = vmatmul.mubr.bf16.gmra.mxu0 %v196
      %v842 = vpop.f32.mrf.mxu0
      %v843 = vadd.f32 %v602, %v842
      %v844 = vpop.f32.mrf.mxu0
      %v845 = vpop.f32.mrf.mxu0
      %v846 = vadd.f32 %v605, %v845
      %v847 = vpop.f32.mrf.mxu0
      %848 = vmatprep.mubr.bf16.mxu0 %v200
      %849 = vmatmul.mubr.bf16.gmra.mxu0 %v199
      %v850 = vpop.f32.mrf.mxu0
      %v851 = vadd.f32 %v610, %v850
      %v852 = vpop.f32.mrf.mxu0
      %v853 = vpop.f32.mrf.mxu0
      %v854 = vadd.f32 %v613, %v853
      %v855 = vpop.f32.mrf.mxu0
      %856 = vmatprep.mubr.bf16.mxu0 %v203
      %857 = vmatmul.mubr.bf16.gmra.mxu0 %v202
      %v858 = vpop.f32.mrf.mxu0
      %v859 = vadd.f32 %v618, %v858
      %v860 = vpop.f32.mrf.mxu0
      %v861 = vpop.f32.mrf.mxu0
      %v862 = vadd.f32 %v621, %v861
      %v863 = vpop.f32.mrf.mxu0
      %864 = vmatprep.mubr.bf16.mxu0 %v206
      %865 = vmatmul.mubr.bf16.gmra.mxu0 %v205
      %v866 = vpop.f32.mrf.mxu0
      %v867 = vadd.f32 %v626, %v866
      %v868 = vpop.f32.mrf.mxu0
      %v869 = vpop.f32.mrf.mxu0
      %v870 = vadd.f32 %v629, %v869
      %v871 = vpop.f32.mrf.mxu0
      %872 = vmatprep.mubr.bf16.mxu0 %v209
      %873 = vmatmul.mubr.bf16.gmra.mxu0 %v208
      %v874 = vpop.f32.mrf.mxu0
      %v875 = vadd.f32 %v634, %v874
      %v876 = vpop.f32.mrf.mxu0
      %v877 = vpop.f32.mrf.mxu0
      %v878 = vadd.f32 %v637, %v877
      %v879 = vpop.f32.mrf.mxu0
      %880 = vmatprep.mubr.bf16.mxu0 %v212
      %881 = vmatmul.mubr.bf16.gmra.mxu0 %v211
      %v882 = vpop.f32.mrf.mxu0
      %v883 = vadd.f32 %v642, %v882
      %v884 = vpop.f32.mrf.mxu0
      %v885 = vpop.f32.mrf.mxu0
      %v886 = vadd.f32 %v645, %v885
      %v887 = vpop.f32.mrf.mxu0
      %888 = vdwg.mxu0
      %889 = vmatprep.subr.bf16.mxu0 0
      %890 = vmatpush1.bf16.msra.mxu0 %v767
      %891 = vmatprep.subr.bf16.mxu0 0
      %892 = vmatpush1.bf16.msra.mxu0 %v766
      %893 = vmatprep.subr.bf16.mxu0 0
      %894 = vmatpush1.bf16.msra.mxu0 %v765
      %895 = vmatprep.subr.bf16.mxu0 0
      %896 = vmatpush1.bf16.msra.mxu0 %v764
      %897 = vmatprep.subr.bf16.mxu0 0
      %898 = vmatpush1.bf16.msra.mxu0 %v763
      %899 = vmatprep.subr.bf16.mxu0 0
      %900 = vmatpush1.bf16.msra.mxu0 %v762
      %901 = vmatprep.subr.bf16.mxu0 0
      %902 = vmatpush1.bf16.msra.mxu0 %v761
      %903 = vmatprep.subr.bf16.mxu0 0
      %904 = vmatpush1.bf16.msra.mxu0 %v760
      %905 = vmatprep.subr.bf16.mxu0 0
      %906 = vmatpush2.bf16.msra.mxu0 0
      %907 = vmatprep.subr.bf16.mxu0 0
      %908 = vmatpush2.bf16.msra.mxu0 0
      %909 = vmatprep.subr.bf16.mxu0 0
      %910 = vmatpush2.bf16.msra.mxu0 0
      %911 = vmatprep.subr.bf16.mxu0 0
      %912 = vmatpush2.bf16.msra.mxu0 0
      %913 = vmatprep.subr.bf16.mxu0 0
      %914 = vmatpush2.bf16.msra.mxu0 0
      %915 = vmatprep.subr.bf16.mxu0 0
      %916 = vmatpush2.bf16.msra.mxu0 0
      %917 = vmatprep.subr.bf16.mxu0 0
      %918 = vmatpush2.bf16.msra.mxu0 0
      %919 = vmatprep.subr.bf16.mxu0 0
      %920 = vmatpush2.bf16.msra.mxu0 0
      %921 = vmatprep.mubr.bf16.mxu0 0
      %922 = vmatmul.mubr.bf16.gmra.mxu0 %v192
      %v923 = vpop.f32.mrf.mxu0
      %v924 = vadd.f32 %v827, %v923
      %v925 = vpop.f32.mrf.mxu0
      %v926 = vpop.f32.mrf.mxu0
      %v927 = vadd.f32 %v830, %v926
      %v928 = vpop.f32.mrf.mxu0
      %929 = vmatprep.mubr.bf16.mxu0 0
      %930 = vmatmul.mubr.bf16.gmra.mxu0 %v195
      %v931 = vpop.f32.mrf.mxu0
      %v932 = vadd.f32 %v835, %v931
      %v933 = vpop.f32.mrf.mxu0
      %v934 = vpop.f32.mrf.mxu0
      %v935 = vadd.f32 %v838, %v934
      %v936 = vpop.f32.mrf.mxu0
      %937 = vmatprep.mubr.bf16.mxu0 0
      %938 = vmatmul.mubr.bf16.gmra.mxu0 %v198
      %v939 = vpop.f32.mrf.mxu0
      %v940 = vadd.f32 %v843, %v939
      %v941 = vpop.f32.mrf.mxu0
      %v942 = vpop.f32.mrf.mxu0
      %v943 = vadd.f32 %v846, %v942
      %v944 = vpop.f32.mrf.mxu0
      %945 = vmatprep.mubr.bf16.mxu0 0
      %946 = vmatmul.mubr.bf16.gmra.mxu0 %v201
      %v947 = vpop.f32.mrf.mxu0
      %v948 = vadd.f32 %v851, %v947
      %v949 = vpop.f32.mrf.mxu0
      %v950 = vpop.f32.mrf.mxu0
      %v951 = vadd.f32 %v854, %v950
      %v952 = vpop.f32.mrf.mxu0
      %953 = vmatprep.mubr.bf16.mxu0 0
      %954 = vmatmul.mubr.bf16.gmra.mxu0 %v204
      %v955 = vpop.f32.mrf.mxu0
      %v956 = vadd.f32 %v859, %v955
      %v957 = vpop.f32.mrf.mxu0
      %v958 = vpop.f32.mrf.mxu0
      %v959 = vadd.f32 %v862, %v958
      %v960 = vpop.f32.mrf.mxu0
      %961 = vmatprep.mubr.bf16.mxu0 0
      %962 = vmatmul.mubr.bf16.gmra.mxu0 %v207
      %v963 = vpop.f32.mrf.mxu0
      %v964 = vadd.f32 %v867, %v963
      %v965 = vpop.f32.mrf.mxu0
      %v966 = vpop.f32.mrf.mxu0
      %v967 = vadd.f32 %v870, %v966
      %v968 = vpop.f32.mrf.mxu0
      %969 = vmatprep.mubr.bf16.mxu0 0
      %970 = vmatmul.mubr.bf16.gmra.mxu0 %v210
      %v971 = vpop.f32.mrf.mxu0
      %v972 = vadd.f32 %v875, %v971
      %v973 = vpop.f32.mrf.mxu0
      %v974 = vpop.f32.mrf.mxu0
      %v975 = vadd.f32 %v878, %v974
      %v976 = vpop.f32.mrf.mxu0
      %977 = vmatprep.mubr.bf16.mxu0 0
      %978 = vmatmul.mubr.bf16.gmra.mxu0 %v213
      %v979 = vpop.f32.mrf.mxu0
      %v980 = vadd.f32 %v883, %v979
      %v981 = vpop.f32.mrf.mxu0
      %v982 = vpop.f32.mrf.mxu0
      %v983 = vadd.f32 %v886, %v982
      %v984 = vpop.f32.mrf.mxu0
      %985 = vdwg.mxu0
      %v986 = vlaneseq
      %v987 = vand.u32 %v986, 127
      %vm988 = vcmp.lt.s32.totalorder %v987, 8
      %v989 = vsel %vm988, %v924, -1e+30
      %v990 = vsel %vm988, %v927, -1e+30
      %v991 = vsel %vm988, %v932, -1e+30
      %v992 = vsel %vm988, %v935, -1e+30
      %v993 = vsel %vm988, %v940, -1e+30
      %v994 = vsel %vm988, %v943, -1e+30
      %v995 = vsel %vm988, %v948, -1e+30
      %v996 = vsel %vm988, %v951, -1e+30
      %v997 = vsel %vm988, %v956, -1e+30
      %v998 = vsel %vm988, %v959, -1e+30
      %v999 = vsel %vm988, %v964, -1e+30
      %v1000 = vsel %vm988, %v967, -1e+30
      %v1001 = vsel %vm988, %v972, -1e+30
      %v1002 = vsel %vm988, %v975, -1e+30
      %v1003 = vsel %vm988, %v980, -1e+30
      %v1004 = vsel %vm988, %v983, -1e+30
      %1005 = vmax.xlane.f32.xlu0 %v989
      %v1006 = vpop.xlane.xlu0 %1005
      %1007 = vmax.xlane.f32.xlu0 %v990
      %v1008 = vpop.xlane.xlu0 %1007
      %1009 = vmax.xlane.f32.xlu0 %v991
      %v1010 = vpop.xlane.xlu0 %1009
      %1011 = vmax.xlane.f32.xlu0 %v992
      %v1012 = vpop.xlane.xlu0 %1011
      %1013 = vmax.xlane.f32.xlu0 %v993
      %v1014 = vpop.xlane.xlu0 %1013
      %1015 = vmax.xlane.f32.xlu0 %v994
      %v1016 = vpop.xlane.xlu0 %1015
      %1017 = vmax.xlane.f32.xlu0 %v995
      %v1018 = vpop.xlane.xlu0 %1017
      %1019 = vmax.xlane.f32.xlu0 %v996
      %v1020 = vpop.xlane.xlu0 %1019
      %1021 = vmax.xlane.f32.xlu0 %v997
      %v1022 = vpop.xlane.xlu0 %1021
      %1023 = vmax.xlane.f32.xlu0 %v998
      %v1024 = vpop.xlane.xlu0 %1023
      %1025 = vmax.xlane.f32.xlu0 %v999
      %v1026 = vpop.xlane.xlu0 %1025
      %1027 = vmax.xlane.f32.xlu0 %v1000
      %v1028 = vpop.xlane.xlu0 %1027
      %1029 = vmax.xlane.f32.xlu0 %v1001
      %v1030 = vpop.xlane.xlu0 %1029
      %1031 = vmax.xlane.f32.xlu0 %v1002
      %v1032 = vpop.xlane.xlu0 %1031
      %1033 = vmax.xlane.f32.xlu0 %v1003
      %v1034 = vpop.xlane.xlu0 %1033
      %1035 = vmax.xlane.f32.xlu0 %v1004
      %v1036 = vpop.xlane.xlu0 %1035
      %v1037 = vsub.f32 %v989, %v1006
      %v1038 = vsub.f32 %v990, %v1008
      %v1039 = vsub.f32 %v991, %v1010
      %v1040 = vsub.f32 %v992, %v1012
      %v1041 = vsub.f32 %v993, %v1014
      %v1042 = vsub.f32 %v994, %v1016
      %v1043 = vsub.f32 %v995, %v1018
      %v1044 = vsub.f32 %v996, %v1020
      %v1045 = vsub.f32 %v997, %v1022
      %v1046 = vsub.f32 %v998, %v1024
      %v1047 = vsub.f32 %v999, %v1026
      %v1048 = vsub.f32 %v1000, %v1028
      %v1049 = vsub.f32 %v1001, %v1030
      %v1050 = vsub.f32 %v1002, %v1032
      %v1051 = vsub.f32 %v1003, %v1034
      %v1052 = vsub.f32 %v1004, %v1036
      %v1053 = vmul.f32 %v1037, 1.442695
      %v1054 = vpow.pop %v1053
      %v1055 = vmul.f32 %v1038, 1.442695
      %v1056 = vpow.pop %v1055
      %v1057 = vmul.f32 %v1039, 1.442695
      %v1058 = vpow.pop %v1057
      %v1059 = vmul.f32 %v1040, 1.442695
      %v1060 = vpow.pop %v1059
      %v1061 = vmul.f32 %v1041, 1.442695
      %v1062 = vpow.pop %v1061
      %v1063 = vmul.f32 %v1042, 1.442695
      %v1064 = vpow.pop %v1063
      %v1065 = vmul.f32 %v1043, 1.442695
      %v1066 = vpow.pop %v1065
      %v1067 = vmul.f32 %v1044, 1.442695
      %v1068 = vpow.pop %v1067
      %v1069 = vmul.f32 %v1045, 1.442695
      %v1070 = vpow.pop %v1069
      %v1071 = vmul.f32 %v1046, 1.442695
      %v1072 = vpow.pop %v1071
      %v1073 = vmul.f32 %v1047, 1.442695
      %v1074 = vpow.pop %v1073
      %v1075 = vmul.f32 %v1048, 1.442695
      %v1076 = vpow.pop %v1075
      %v1077 = vmul.f32 %v1049, 1.442695
      %v1078 = vpow.pop %v1077
      %v1079 = vmul.f32 %v1050, 1.442695
      %v1080 = vpow.pop %v1079
      %v1081 = vmul.f32 %v1051, 1.442695
      %v1082 = vpow.pop %v1081
      %v1083 = vmul.f32 %v1052, 1.442695
      %v1084 = vpow.pop %v1083
      %1085 = vadd.xlane.f32.xlu0 %v1054
      %v1086 = vpop.xlane.xlu0 %1085
      %1087 = vadd.xlane.f32.xlu0 %v1056
      %v1088 = vpop.xlane.xlu0 %1087
      %1089 = vadd.xlane.f32.xlu0 %v1058
      %v1090 = vpop.xlane.xlu0 %1089
      %1091 = vadd.xlane.f32.xlu0 %v1060
      %v1092 = vpop.xlane.xlu0 %1091
      %1093 = vadd.xlane.f32.xlu0 %v1062
      %v1094 = vpop.xlane.xlu0 %1093
      %1095 = vadd.xlane.f32.xlu0 %v1064
      %v1096 = vpop.xlane.xlu0 %1095
      %1097 = vadd.xlane.f32.xlu0 %v1066
      %v1098 = vpop.xlane.xlu0 %1097
      %1099 = vadd.xlane.f32.xlu0 %v1068
      %v1100 = vpop.xlane.xlu0 %1099
      %1101 = vadd.xlane.f32.xlu0 %v1070
      %v1102 = vpop.xlane.xlu0 %1101
      %1103 = vadd.xlane.f32.xlu0 %v1072
      %v1104 = vpop.xlane.xlu0 %1103
      %1105 = vadd.xlane.f32.xlu0 %v1074
      %v1106 = vpop.xlane.xlu0 %1105
      %1107 = vadd.xlane.f32.xlu0 %v1076
      %v1108 = vpop.xlane.xlu0 %1107
      %1109 = vadd.xlane.f32.xlu0 %v1078
      %v1110 = vpop.xlane.xlu0 %1109
      %1111 = vadd.xlane.f32.xlu0 %v1080
      %v1112 = vpop.xlane.xlu0 %1111
      %1113 = vadd.xlane.f32.xlu0 %v1082
      %v1114 = vpop.xlane.xlu0 %1113
      %1115 = vadd.xlane.f32.xlu0 %v1084
      %v1116 = vpop.xlane.xlu0 %1115
      %v1117 = vlog2.pop %v1086
      %v1118 = vmul.f32 %v1117, 0.6931472
      %v1119 = vlog2.pop %v1088
      %v1120 = vmul.f32 %v1119, 0.6931472
      %v1121 = vlog2.pop %v1090
      %v1122 = vmul.f32 %v1121, 0.6931472
      %v1123 = vlog2.pop %v1092
      %v1124 = vmul.f32 %v1123, 0.6931472
      %v1125 = vlog2.pop %v1094
      %v1126 = vmul.f32 %v1125, 0.6931472
      %v1127 = vlog2.pop %v1096
      %v1128 = vmul.f32 %v1127, 0.6931472
      %v1129 = vlog2.pop %v1098
      %v1130 = vmul.f32 %v1129, 0.6931472
      %v1131 = vlog2.pop %v1100
      %v1132 = vmul.f32 %v1131, 0.6931472
      %v1133 = vlog2.pop %v1102
      %v1134 = vmul.f32 %v1133, 0.6931472
      %v1135 = vlog2.pop %v1104
      %v1136 = vmul.f32 %v1135, 0.6931472
      %v1137 = vlog2.pop %v1106
      %v1138 = vmul.f32 %v1137, 0.6931472
      %v1139 = vlog2.pop %v1108
      %v1140 = vmul.f32 %v1139, 0.6931472
      %v1141 = vlog2.pop %v1110
      %v1142 = vmul.f32 %v1141, 0.6931472
      %v1143 = vlog2.pop %v1112
      %v1144 = vmul.f32 %v1143, 0.6931472
      %v1145 = vlog2.pop %v1114
      %v1146 = vmul.f32 %v1145, 0.6931472
      %v1147 = vlog2.pop %v1116
      %v1148 = vmul.f32 %v1147, 0.6931472
      %v1149 = vsub.f32 %v1037, %v1118
      %v1150 = vsub.f32 %v1038, %v1120
      %v1151 = vsub.f32 %v1039, %v1122
      %v1152 = vsub.f32 %v1040, %v1124
      %v1153 = vsub.f32 %v1041, %v1126
      %v1154 = vsub.f32 %v1042, %v1128
      %v1155 = vsub.f32 %v1043, %v1130
      %v1156 = vsub.f32 %v1044, %v1132
      %v1157 = vsub.f32 %v1045, %v1134
      %v1158 = vsub.f32 %v1046, %v1136
      %v1159 = vsub.f32 %v1047, %v1138
      %v1160 = vsub.f32 %v1048, %v1140
      %v1161 = vsub.f32 %v1049, %v1142
      %v1162 = vsub.f32 %v1050, %v1144
      %v1163 = vsub.f32 %v1051, %v1146
      %v1164 = vsub.f32 %v1052, %v1148
      %1165 = vst [vmem:[%s175] sm:$0xff] %v1149
      %1166 = vst [vmem:[%s175 + $0x8] sm:$0xff] %v1150
      %1167 = vst [vmem:[%s175 + $0x10] sm:$0xff] %v1151
      %1168 = vst [vmem:[%s175 + $0x18] sm:$0xff] %v1152
      %1169 = vst [vmem:[%s175 + $0x20] sm:$0xff] %v1153
      %1170 = vst [vmem:[%s175 + $0x28] sm:$0xff] %v1154
      %1171 = vst [vmem:[%s175 + $0x30] sm:$0xff] %v1155
      %1172 = vst [vmem:[%s175 + $0x38] sm:$0xff] %v1156
      %1173 = vst [vmem:[%s175 + $0x40] sm:$0xff] %v1157
      %1174 = vst [vmem:[%s175 + $0x48] sm:$0xff] %v1158
      %1175 = vst [vmem:[%s175 + $0x50] sm:$0xff] %v1159
      %1176 = vst [vmem:[%s175 + $0x58] sm:$0xff] %v1160
      %1177 = vst [vmem:[%s175 + $0x60] sm:$0xff] %v1161
      %1178 = vst [vmem:[%s175 + $0x68] sm:$0xff] %v1162
      %1179 = vst [vmem:[%s175 + $0x70] sm:$0xff] %v1163
      %1180 = vst [vmem:[%s175 + $0x78] sm:$0xff] %v1164
      %s1181 = smul.u32 16, %s14
      %p1182 = scmp.lt.s32.totalorder %s1181, 47
      %s1183 = scalar_select %p1182, %s1181, 47
      %s1184 = smul.addr %s1183, 8
      %s1185 = scalar_lea.vmem %s3, %s1184
      // Predicated region
      $region33: #{gnn_forward.3} parent=31 // pred_check
        %p1186 = pneg %p100
      $region34: #{gnn_forward.3} parent=31 // pred_check_branch
        %1188 = sbr.rel (%p1186) target = $region36
      $region35: #{gnn_forward.3} parent=31 // pred_region
        %s1189 = smul.u32 16, %s14
      $region36: #{gnn_forward.3} parent=31 // pred_fallthru
        _
    $region32: #{gnn_forward.3} parent=5 // pred_fallthru
      _
    %p1190 = scmp.le.s32.totalorder 2, %s9
    // Predicated region
    $region37: #{gnn_forward.3} parent=5 // pred_check
      %p1191 = pneg %p1190
    $region38: #{gnn_forward.3} parent=5 // pred_check_branch
      %1193 = sbr.rel (%p1191) target = $region40
    $region39: #{gnn_forward.3} parent=5 // pred_region
      %s1194 = ssub.s32 %s9, 2
      // Predicated region
      $region41: #{gnn_forward.3} parent=39 // pred_check
        %p1195 = pneg %p106
      $region42: #{gnn_forward.3} parent=39 // pred_check_branch
        %1197 = sbr.rel (%p1195) target = $region44
      $region43: #{gnn_forward.3} parent=39 // pred_region
        %s1198 = smul.u32 16, %s15
        %p1199 = scmp.lt.s32.totalorder %s1198, 47
        %s1200 = scalar_select %p1199, %s1198, 47
        %s1201 = smul.addr %s1200, 8
        %s1202 = scalar_lea.vmem %s3, %s1201
      $region44: #{gnn_forward.3} parent=39 // pred_fallthru
        _
    $region40: #{gnn_forward.3} parent=5 // pred_fallthru
      _
  $region6: #{gnn_forward.3} parent=0 // loop_footer
    %s13 = sadd.s32 1, %s9
  $region7: #{gnn_forward.3} parent=0 // loop_footer_branch
    %8 = sbr.rel target = $region3
  $region8: #{gnn_forward.3} parent=0 // loop_exit
    _

// kernel: gnn_forward.2
$region0: #{gnn_forward.2}
  #allocation0 [shape = 'u32[]', space=smem, size = 0x4, offset = 0x4, fixed_abs, tag = 'smem constant byte address 0x4 - core index']
  #allocation1 [shape = 'u32[144,128]{1,0:T(1,128)}', space=vmem, size = 0x12000, scoped, tag = 'internal scratch']
  %s0 = inlined_call_operand.vmem [shape: bf16[384,128], index: 0, kind: input, shape index: {}]
  %s1 = inlined_call_operand.vmem [shape: bf16[384,128], index: 1, kind: input, shape index: {}]
  %s2 = inlined_call_operand.vmem [shape: bf16[128,128], index: 2, kind: input, shape index: {}]
  %s3 = inlined_call_operand.vmem [shape: bf16[128,128], index: 3, kind: input, shape index: {}]
  %s4 = inlined_call_operand.vmem [shape: s8[384,384], index: 4, kind: input, shape index: {}]
  %s5 = inlined_call_operand.vmem [shape: bf16[384,128], index: 5, kind: output, shape index: {0}]
  %s6 = inlined_call_operand.vmem [shape: bf16[384,128], index: 6, kind: output, shape index: {1}]
  %7 = xla_tuple %s5, %s6
  %s8 = sld [smem:[#allocation0]]
  $region61: #{gnn_forward.2} parent=0
    _
  %s10 = ssub.s32 1, %s8
  %s11 = scalar_select 0, %s10, %s8
  loop: start=0, step=1, limit=5
  $region2: #{gnn_forward.2} parent=0 // loop_pre_header
    _
  $region3: #{gnn_forward.2} parent=0 // loop_header
    %s13 = sphi 0, %s17
    %p14 = scmp.ge.s32.totalorder %s13, 5
    %s21 = sphi 0, %s21
    %s23 = sphi 0, %s21
    %s24 = sphi 0, %s23
    %s38 = sphi 0, %s24
    %s42 = sphi 0, %s42
    %s44 = sphi 0, %s42
    %s45 = sphi 0, %s44
    %s59 = sphi 0, %s45
    %s63 = sphi 0, %s63
    %s65 = sphi 0, %s63
    %s66 = sphi 0, %s65
    %s80 = sphi 0, %s66
    %s84 = sphi 0, %s84
    %s86 = sphi 0, %s84
    %s87 = sphi 0, %s86
    %s101 = sphi 0, %s87
    %s107 = sphi 0, %s109
    %s110 = sphi 0, %s107
    %s111 = sphi 0, %s110
    %s127 = sphi 0, %s111
    %s133 = sphi 0, %s135
    %s136 = sphi 0, %s133
    %s137 = sphi 0, %s136
    %s153 = sphi 0, %s137
    %s159 = sphi 0, %s161
    %s162 = sphi 0, %s159
    %s163 = sphi 0, %s162
    %s179 = sphi 0, %s163
  $region4: #{gnn_forward.2} parent=0 // loop_header_branch
    %16 = sbr.rel (%p14) target = $region8
  $region5: #{gnn_forward.2} parent=0 // loop_body
    %s18 = ssub.s32 %s13, 1
    %s19 = ssub.s32 %s13, 2
    %s20 = sadd.s32 %s13, 1
    %s22 = sadd.s32 %s21, 1
    %p25 = scmp.eq.s32.totalorder %s13, 2
    %p26 = scmp.ne.s32.totalorder %s21, %s23
    %p27 = scmp.eq.s32.totalorder %s13, 0
    %p28 = por %p26, %p27
    %p29 = scmp.ne.s32.totalorder %s21, %s23
    %p30 = scmp.eq.s32.totalorder %s18, 2
    %p31 = por %p29, %p30
    %p32 = scmp.ne.s32.totalorder %s23, %s24
    %p33 = scmp.eq.s32.totalorder %s18, 0
    %p34 = por %p32, %p33
    %p35 = scmp.ne.s32.totalorder %s23, %s24
    %p36 = scmp.eq.s32.totalorder %s19, 2
    %p37 = por %p35, %p36
    %p39 = scmp.ne.s32.totalorder %s24, %s38
    %p40 = scmp.eq.s32.totalorder %s19, 0
    %p41 = por %p39, %p40
    %s43 = sadd.s32 %s42, 1
    %p46 = scmp.eq.s32.totalorder %s13, 2
    %p47 = scmp.ne.s32.totalorder %s42, %s44
    %p48 = scmp.eq.s32.totalorder %s13, 0
    %p49 = por %p47, %p48
    %p50 = scmp.ne.s32.totalorder %s42, %s44
    %p51 = scmp.eq.s32.totalorder %s18, 2
    %p52 = por %p50, %p51
    %p53 = scmp.ne.s32.totalorder %s44, %s45
    %p54 = scmp.eq.s32.totalorder %s18, 0
    %p55 = por %p53, %p54
    %p56 = scmp.ne.s32.totalorder %s44, %s45
    %p57 = scmp.eq.s32.totalorder %s19, 2
    %p58 = por %p56, %p57
    %p60 = scmp.ne.s32.totalorder %s45, %s59
    %p61 = scmp.eq.s32.totalorder %s19, 0
    %p62 = por %p60, %p61
    %s64 = sadd.s32 %s63, 1
    %p67 = scmp.eq.s32.totalorder %s13, 2
    %p68 = scmp.ne.s32.totalorder %s63, %s65
    %p69 = scmp.eq.s32.totalorder %s13, 0
    %p70 = por %p68, %p69
    %p71 = scmp.ne.s32.totalorder %s63, %s65
    %p72 = scmp.eq.s32.totalorder %s18, 2
    %p73 = por %p71, %p72
    %p74 = scmp.ne.s32.totalorder %s65, %s66
    %p75 = scmp.eq.s32.totalorder %s18, 0
    %p76 = por %p74, %p75
    %p77 = scmp.ne.s32.totalorder %s65, %s66
    %p78 = scmp.eq.s32.totalorder %s19, 2
    %p79 = por %p77, %p78
    %p81 = scmp.ne.s32.totalorder %s66, %s80
    %p82 = scmp.eq.s32.totalorder %s19, 0
    %p83 = por %p81, %p82
    %s85 = sadd.s32 %s84, 1
    %p88 = scmp.eq.s32.totalorder %s13, 2
    %p89 = scmp.ne.s32.totalorder %s84, %s86
    %p90 = scmp.eq.s32.totalorder %s13, 0
    %p91 = por %p89, %p90
    %p92 = scmp.ne.s32.totalorder %s84, %s86
    %p93 = scmp.eq.s32.totalorder %s18, 2
    %p94 = por %p92, %p93
    %p95 = scmp.ne.s32.totalorder %s86, %s87
    %p96 = scmp.eq.s32.totalorder %s18, 0
    %p97 = por %p95, %p96
    %p98 = scmp.ne.s32.totalorder %s86, %s87
    %p99 = scmp.eq.s32.totalorder %s19, 2
    %p100 = por %p98, %p99
    %p102 = scmp.ne.s32.totalorder %s87, %s101
    %p103 = scmp.eq.s32.totalorder %s19, 0
    %p104 = por %p102, %p103
    %s105 = ssub.s32 %s13, %s20
    %p106 = scmp.eq.s32.totalorder %s105, 0
    %s108 = sadd.s32 %s107, 1
    %s109 = scalar_select %p106, %s107, %s108
    %p112 = pneg %p106
    %p113 = scmp.eq.s32.totalorder %s13, 2
    %p114 = por %p112, %p113
    %p115 = scmp.ne.s32.totalorder %s107, %s110
    %p116 = scmp.eq.s32.totalorder %s13, 0
    %p117 = por %p115, %p116
    %p118 = scmp.ne.s32.totalorder %s107, %s110
    %p119 = scmp.eq.s32.totalorder %s18, 2
    %p120 = por %p118, %p119
    %p121 = scmp.ne.s32.totalorder %s110, %s111
    %p122 = scmp.eq.s32.totalorder %s18, 0
    %p123 = por %p121, %p122
    %p124 = scmp.ne.s32.totalorder %s110, %s111
    %p125 = scmp.eq.s32.totalorder %s19, 2
    %p126 = por %p124, %p125
    %p128 = scmp.ne.s32.totalorder %s111, %s127
    %p129 = scmp.eq.s32.totalorder %s19, 0
    %p130 = por %p128, %p129
    %s131 = ssub.s32 %s13, %s20
    %p132 = scmp.eq.s32.totalorder %s131, 0
    %s134 = sadd.s32 %s133, 1
    %s135 = scalar_select %p132, %s133, %s134
    %p138 = pneg %p132
    %p139 = scmp.eq.s32.totalorder %s13, 2
    %p140 = por %p138, %p139
    %p141 = scmp.ne.s32.totalorder %s133, %s136
    %p142 = scmp.eq.s32.totalorder %s13, 0
    %p143 = por %p141, %p142
    %p144 = scmp.ne.s32.totalorder %s133, %s136
    %p145 = scmp.eq.s32.totalorder %s18, 2
    %p146 = por %p144, %p145
    %p147 = scmp.ne.s32.totalorder %s136, %s137
    %p148 = scmp.eq.s32.totalorder %s18, 0
    %p149 = por %p147, %p148
    %p150 = scmp.ne.s32.totalorder %s136, %s137
    %p151 = scmp.eq.s32.totalorder %s19, 2
    %p152 = por %p150, %p151
    %p154 = scmp.ne.s32.totalorder %s137, %s153
    %p155 = scmp.eq.s32.totalorder %s19, 0
    %p156 = por %p154, %p155
    %s157 = ssub.s32 %s13, %s20
    %p158 = scmp.eq.s32.totalorder %s157, 0
    %s160 = sadd.s32 %s159, 1
    %s161 = scalar_select %p158, %s159, %s160
    %p164 = pneg %p158
    %p165 = scmp.eq.s32.totalorder %s13, 2
    %p166 = por %p164, %p165
    %p167 = scmp.ne.s32.totalorder %s159, %s162
    %p168 = scmp.eq.s32.totalorder %s13, 0
    %p169 = por %p167, %p168
    %p170 = scmp.ne.s32.totalorder %s159, %s162
    %p171 = scmp.eq.s32.totalorder %s18, 2
    %p172 = por %p170, %p171
    %p173 = scmp.ne.s32.totalorder %s162, %s163
    %p174 = scmp.eq.s32.totalorder %s18, 0
    %p175 = por %p173, %p174
    %p176 = scmp.ne.s32.totalorder %s162, %s163
    %p177 = scmp.eq.s32.totalorder %s19, 2
    %p178 = por %p176, %p177
    %p180 = scmp.ne.s32.totalorder %s163, %s179
    %p181 = scmp.eq.s32.totalorder %s19, 0
    %p182 = por %p180, %p181
    %p183 = scmp.le.s32.totalorder 1, %s13
    %p184 = scmp.lt.s32.totalorder %s13, 4
    %p185 = pnand %p183, %p184
    %p186 = pneg %p185
    // Predicated region
    $region9: #{gnn_forward.2} parent=5 // pred_check
      _
    $region10: #{gnn_forward.2} parent=5 // pred_check_branch
      %188 = sbr.rel (%p185) target = $region12
    $region11: #{gnn_forward.2} parent=5 // pred_region
      %s189 = ssub.s32 %s13, 1
      // Predicated region
      $region13: #{gnn_forward.2} parent=11 // pred_check
        %p190 = pneg %p34
      $region14: #{gnn_forward.2} parent=11 // pred_check_branch
        %192 = sbr.rel (%p190) target = $region16
      $region15: #{gnn_forward.2} parent=11 // pred_region
        _
      $region16: #{gnn_forward.2} parent=11 // pred_fallthru
        _
      // Predicated region
      $region17: #{gnn_forward.2} parent=11 // pred_check
        %p193 = pneg %p55
      $region18: #{gnn_forward.2} parent=11 // pred_check_branch
        %195 = sbr.rel (%p193) target = $region20
      $region19: #{gnn_forward.2} parent=11 // pred_region
        _
      $region20: #{gnn_forward.2} parent=11 // pred_fallthru
        _
      // Predicated region
      $region21: #{gnn_forward.2} parent=11 // pred_check
        %p196 = pneg %p76
      $region22: #{gnn_forward.2} parent=11 // pred_check_branch
        %198 = sbr.rel (%p196) target = $region24
      $region23: #{gnn_forward.2} parent=11 // pred_region
        _
      $region24: #{gnn_forward.2} parent=11 // pred_fallthru
        _
      // Predicated region
      $region25: #{gnn_forward.2} parent=11 // pred_check
        %p199 = pneg %p97
      $region26: #{gnn_forward.2} parent=11 // pred_check_branch
        %201 = sbr.rel (%p199) target = $region28
      $region27: #{gnn_forward.2} parent=11 // pred_region
        _
      $region28: #{gnn_forward.2} parent=11 // pred_fallthru
        _
    $region12: #{gnn_forward.2} parent=5 // pred_fallthru
      _
    %p202 = scmp.lt.s32.totalorder %s13, 3
    // Predicated region
    $region29: #{gnn_forward.2} parent=5 // pred_check
      %p203 = pneg %p202
    $region30: #{gnn_forward.2} parent=5 // pred_check_branch
      %205 = sbr.rel (%p203) target = $region32
    $region31: #{gnn_forward.2} parent=5 // pred_region
      // Predicated region
      $region33: #{gnn_forward.2} parent=31 // pred_check
        %p206 = pneg %p117
      $region34: #{gnn_forward.2} parent=31 // pred_check_branch
        %208 = sbr.rel (%p206) target = $region36
      $region35: #{gnn_forward.2} parent=31 // pred_region
        %s209 = smul.u32 4, %s13
        %p210 = scmp.lt.s32.totalorder %s209, 11
        %s211 = scalar_select %p210, %s209, 11
        %s212 = smul.addr %s211, 3
        %s213 = smul.addr %s212, 8
        %s214 = scalar_lea.vmem %s4, %s213
        %s215 = smul.u32 4, %s13
      $region36: #{gnn_forward.2} parent=31 // pred_fallthru
        _
    $region32: #{gnn_forward.2} parent=5 // pred_fallthru
      _
    %p216 = scmp.le.s32.totalorder 1, %s13
    %p217 = scmp.lt.s32.totalorder %s13, 4
    %p218 = pnand %p216, %p217
    %p219 = pneg %p218
    // Predicated region
    $region37: #{gnn_forward.2} parent=5 // pred_check
      _
    $region38: #{gnn_forward.2} parent=5 // pred_check_branch
      %221 = sbr.rel (%p218) target = $region40
    $region39: #{gnn_forward.2} parent=5 // pred_region
      %s222 = ssub.s32 %s13, 1
      %p223 = pneg %p34
      %p224 = pneg %p31
      %p225 = pneg %p55
      %p226 = pneg %p52
      %p227 = pneg %p76
      %p228 = pneg %p73
      %p229 = pneg %p97
      %p230 = pneg %p94
      %s231 = smul.u32 4, %s18
      %p232 = scmp.lt.s32.totalorder %s231, 11
      %s233 = scalar_select %p232, %s231, 11
      %s234 = smul.addr %s233, 3
      %s235 = smul.addr %s234, 8
      %s236 = scalar_lea.vmem %s4, %s235
      %p237 = pneg %p123
      %p238 = pneg %p120
      %p239 = pneg %p149
      %p240 = pneg %p146
      %s241 = smul.u32 16, %s18
      %p242 = scmp.lt.s32.totalorder %s241, 47
      %s243 = scalar_select %p242, %s241, 47
      %s244 = smul.addr %s243, 4
      %s245 = scalar_lea.vmem %s5, %s244
      %p246 = pneg %p175
      %p247 = pneg %p172
      %s248 = smul.u32 16, %s18
      %p249 = scmp.lt.s32.totalorder %s248, 47
      %s250 = scalar_select %p249, %s248, 47
      %s251 = smul.addr %s250, 4
      %s252 = scalar_lea.vmem %s6, %s251
      %s253 = smul.u32 4, %s18
      %p254 = scmp.lt.s32.totalorder %s253, 11
      %s255 = scalar_select %p254, %s253, 11
      %s256 = smul.addr %s255, 3
      %s257 = smul.addr %s256, 8
      %s258 = scalar_lea.vmem %s4, %s257
      %s259 = smul.u32 4, %s18
      %s260 = smul.u32 16, %s18
      %p261 = scmp.lt.s32.totalorder %s260, 47
      %s262 = scalar_select %p261, %s260, 47
      %s263 = smul.addr %s262, 4
      %s264 = scalar_lea.vmem %s5, %s263
      %s265 = smul.u32 16, %s18
      %s266 = smul.u32 16, %s18
      %p267 = scmp.lt.s32.totalorder %s266, 47
      %s268 = scalar_select %p267, %s266, 47
      %s269 = smul.addr %s268, 4
      %s270 = scalar_lea.vmem %s6, %s269
      %s271 = smul.u32 16, %s18
      %v273 = vld [vmem:[%s258] sm:$0xff]
      %v274 = vld [vmem:[%s258 + $0x8] sm:$0xff]
      %v275 = vld [vmem:[%s258 + $0x10] sm:$0xff]
      %v276 = vld [vmem:[%s258 + $0x18] sm:$0xff]
      %v277 = vld [vmem:[%s258 + $0x20] sm:$0xff]
      %v278 = vld [vmem:[%s258 + $0x28] sm:$0xff]
      %v279 = vld [vmem:[%s258 + $0x30] sm:$0xff]
      %v280 = vld [vmem:[%s258 + $0x38] sm:$0xff]
      %v281 = vld [vmem:[%s258 + $0x40] sm:$0xff]
      %v282 = vld [vmem:[%s258 + $0x48] sm:$0xff]
      %v283 = vld [vmem:[%s258 + $0x50] sm:$0xff]
      %v284 = vld [vmem:[%s258 + $0x58] sm:$0xff]
      %v285 = vunpack.c.l.s8.bf16 %v273
      %v286 = vunpack.c.l.s8.bf16 %v274
      %v287 = vunpack.c.l.s8.bf16 %v275
      %v288 = vunpack.c.h.s8.bf16 %v273
      %v289 = vunpack.c.h.s8.bf16 %v274
      %v290 = vunpack.c.h.s8.bf16 %v275
      %v291 = vunpack.c.l.s8.bf16 %v276
      %v292 = vunpack.c.l.s8.bf16 %v277
      %v293 = vunpack.c.l.s8.bf16 %v278
      %v294 = vunpack.c.h.s8.bf16 %v276
      %v295 = vunpack.c.h.s8.bf16 %v277
      %v296 = vunpack.c.h.s8.bf16 %v278
      %v297 = vunpack.c.l.s8.bf16 %v279
      %v298 = vunpack.c.l.s8.bf16 %v280
      %v299 = vunpack.c.l.s8.bf16 %v281
      %v300 = vunpack.c.h.s8.bf16 %v279
      %v301 = vunpack.c.h.s8.bf16 %v280
      %v302 = vunpack.c.h.s8.bf16 %v281
      %v303 = vunpack.c.l.s8.bf16 %v282
      %v304 = vunpack.c.l.s8.bf16 %v283
      %v305 = vunpack.c.l.s8.bf16 %v284
      %v306 = vunpack.c.h.s8.bf16 %v282
      %v307 = vunpack.c.h.s8.bf16 %v283
      %v308 = vunpack.c.h.s8.bf16 %v284
      %v309 = vld [vmem:[%s0] sm:$0xf]
      %v310 = vld [vmem:[%s0 + $0x4] sm:$0xf]
      %v311 = vld [vmem:[%s0 + $0x8] sm:$0xf]
      %v312 = vld [vmem:[%s0 + $0xc] sm:$0xf]
      %v313 = vld [vmem:[%s0 + $0x10] sm:$0xf]
      %v314 = vld [vmem:[%s0 + $0x14] sm:$0xf]
      %v315 = vld [vmem:[%s0 + $0x18] sm:$0xf]
      %v316 = vld [vmem:[%s0 + $0x1c] sm:$0xf]
      %v317 = vld [vmem:[%s0 + $0x20] sm:$0xf]
      %v318 = vld [vmem:[%s0 + $0x24] sm:$0xf]
      %v319 = vld [vmem:[%s0 + $0x28] sm:$0xf]
      %v320 = vld [vmem:[%s0 + $0x2c] sm:$0xf]
      %v321 = vld [vmem:[%s0 + $0x30] sm:$0xf]
      %v322 = vld [vmem:[%s0 + $0x34] sm:$0xf]
      %v323 = vld [vmem:[%s0 + $0x38] sm:$0xf]
      %v324 = vld [vmem:[%s0 + $0x3c] sm:$0xf]
      %v325 = vld [vmem:[%s0 + $0x40] sm:$0xf]
      %v326 = vld [vmem:[%s0 + $0x44] sm:$0xf]
      %v327 = vld [vmem:[%s0 + $0x48] sm:$0xf]
      %v328 = vld [vmem:[%s0 + $0x4c] sm:$0xf]
      %v329 = vld [vmem:[%s0 + $0x50] sm:$0xf]
      %v330 = vld [vmem:[%s0 + $0x54] sm:$0xf]
      %v331 = vld [vmem:[%s0 + $0x58] sm:$0xf]
      %v332 = vld [vmem:[%s0 + $0x5c] sm:$0xf]
      %v333 = vld [vmem:[%s0 + $0x60] sm:$0xf]
      %v334 = vld [vmem:[%s0 + $0x64] sm:$0xf]
      %v335 = vld [vmem:[%s0 + $0x68] sm:$0xf]
      %v336 = vld [vmem:[%s0 + $0x6c] sm:$0xf]
      %v337 = vld [vmem:[%s0 + $0x70] sm:$0xf]
      %v338 = vld [vmem:[%s0 + $0x74] sm:$0xf]
      %v339 = vld [vmem:[%s0 + $0x78] sm:$0xf]
      %v340 = vld [vmem:[%s0 + $0x7c] sm:$0xf]
      %v341 = vld [vmem:[%s0 + $0x80] sm:$0xf]
      %v342 = vld [vmem:[%s0 + $0x84] sm:$0xf]
      %v343 = vld [vmem:[%s0 + $0x88] sm:$0xf]
      %v344 = vld [vmem:[%s0 + $0x8c] sm:$0xf]
      %v345 = vld [vmem:[%s0 + $0x90] sm:$0xf]
      %v346 = vld [vmem:[%s0 + $0x94] sm:$0xf]
      %v347 = vld [vmem:[%s0 + $0x98] sm:$0xf]
      %v348 = vld [vmem:[%s0 + $0x9c] sm:$0xf]
      %v349 = vld [vmem:[%s0 + $0xa0] sm:$0xf]
      %v350 = vld [vmem:[%s0 + $0xa4] sm:$0xf]
      %v351 = vld [vmem:[%s0 + $0xa8] sm:$0xf]
      %v352 = vld [vmem:[%s0 + $0xac] sm:$0xf]
      %v353 = vld [vmem:[%s0 + $0xb0] sm:$0xf]
      %v354 = vld [vmem:[%s0 + $0xb4] sm:$0xf]
      %v355 = vld [vmem:[%s0 + $0xb8] sm:$0xf]
      %v356 = vld [vmem:[%s0 + $0xbc] sm:$0xf]
      %v357 = vld [vmem:[%s1] sm:$0xf]
      %v358 = vld [vmem:[%s1 + $0x4] sm:$0xf]
      %v359 = vld [vmem:[%s1 + $0x8] sm:$0xf]
      %v360 = vld [vmem:[%s1 + $0xc] sm:$0xf]
      %v361 = vld [vmem:[%s1 + $0x10] sm:$0xf]
      %v362 = vld [vmem:[%s1 + $0x14] sm:$0xf]
      %v363 = vld [vmem:[%s1 + $0x18] sm:$0xf]
      %v364 = vld [vmem:[%s1 + $0x1c] sm:$0xf]
      %v365 = vld [vmem:[%s1 + $0x20] sm:$0xf]
      %v366 = vld [vmem:[%s1 + $0x24] sm:$0xf]
      %v367 = vld [vmem:[%s1 + $0x28] sm:$0xf]
      %v368 = vld [vmem:[%s1 + $0x2c] sm:$0xf]
      %v369 = vld [vmem:[%s1 + $0x30] sm:$0xf]
      %v370 = vld [vmem:[%s1 + $0x34] sm:$0xf]
      %v371 = vld [vmem:[%s1 + $0x38] sm:$0xf]
      %v372 = vld [vmem:[%s1 + $0x3c] sm:$0xf]
      %v373 = vld [vmem:[%s1 + $0x40] sm:$0xf]
      %v374 = vld [vmem:[%s1 + $0x44] sm:$0xf]
      %v375 = vld [vmem:[%s1 + $0x48] sm:$0xf]
      %v376 = vld [vmem:[%s1 + $0x4c] sm:$0xf]
      %v377 = vld [vmem:[%s1 + $0x50] sm:$0xf]
      %v378 = vld [vmem:[%s1 + $0x54] sm:$0xf]
      %v379 = vld [vmem:[%s1 + $0x58] sm:$0xf]
      %v380 = vld [vmem:[%s1 + $0x5c] sm:$0xf]
      %v381 = vld [vmem:[%s1 + $0x60] sm:$0xf]
      %v382 = vld [vmem:[%s1 + $0x64] sm:$0xf]
      %v383 = vld [vmem:[%s1 + $0x68] sm:$0xf]
      %v384 = vld [vmem:[%s1 + $0x6c] sm:$0xf]
      %v385 = vld [vmem:[%s1 + $0x70] sm:$0xf]
      %v386 = vld [vmem:[%s1 + $0x74] sm:$0xf]
      %v387 = vld [vmem:[%s1 + $0x78] sm:$0xf]
      %v388 = vld [vmem:[%s1 + $0x7c] sm:$0xf]
      %v389 = vld [vmem:[%s1 + $0x80] sm:$0xf]
      %v390 = vld [vmem:[%s1 + $0x84] sm:$0xf]
      %v391 = vld [vmem:[%s1 + $0x88] sm:$0xf]
      %v392 = vld [vmem:[%s1 + $0x8c] sm:$0xf]
      %v393 = vld [vmem:[%s1 + $0x90] sm:$0xf]
      %v394 = vld [vmem:[%s1 + $0x94] sm:$0xf]
      %v395 = vld [vmem:[%s1 + $0x98] sm:$0xf]
      %v396 = vld [vmem:[%s1 + $0x9c] sm:$0xf]
      %v397 = vld [vmem:[%s1 + $0xa0] sm:$0xf]
      %v398 = vld [vmem:[%s1 + $0xa4] sm:$0xf]
      %v399 = vld [vmem:[%s1 + $0xa8] sm:$0xf]
      %v400 = vld [vmem:[%s1 + $0xac] sm:$0xf]
      %v401 = vld [vmem:[%s1 + $0xb0] sm:$0xf]
      %v402 = vld [vmem:[%s1 + $0xb4] sm:$0xf]
      %v403 = vld [vmem:[%s1 + $0xb8] sm:$0xf]
      %v404 = vld [vmem:[%s1 + $0xbc] sm:$0xf]
      %v453 = vunpack.c.l.b16 %v357
      %v454 = vunpack.c.l.b16 %v358
      %v455 = vunpack.c.l.b16 %v359
      %v456 = vunpack.c.l.b16 %v360
      %v457 = vunpack.c.l.b16 %v361
      %v458 = vunpack.c.l.b16 %v362
      %v459 = vunpack.c.l.b16 %v363
      %v460 = vunpack.c.l.b16 %v364
      %v461 = vunpack.c.l.b16 %v365
      %v462 = vunpack.c.l.b16 %v366
      %v463 = vunpack.c.l.b16 %v367
      %v464 = vunpack.c.l.b16 %v368
      %v465 = vunpack.c.l.b16 %v369
      %v466 = vunpack.c.l.b16 %v370
      %v467 = vunpack.c.l.b16 %v371
      %v468 = vunpack.c.l.b16 %v372
      %v469 = vunpack.c.l.b16 %v373
      %v470 = vunpack.c.l.b16 %v374
      %v471 = vunpack.c.l.b16 %v375
      %v472 = vunpack.c.l.b16 %v376
      %v473 = vunpack.c.l.b16 %v377
      %v474 = vunpack.c.l.b16 %v378
      %v475 = vunpack.c.l.b16 %v379
      %v476 = vunpack.c.l.b16 %v380
      %v477 = vunpack.c.l.b16 %v381
      %v478 = vunpack.c.l.b16 %v382
      %v479 = vunpack.c.l.b16 %v383
      %v480 = vunpack.c.l.b16 %v384
      %v481 = vunpack.c.l.b16 %v385
      %v482 = vunpack.c.l.b16 %v386
      %v483 = vunpack.c.l.b16 %v387
      %v484 = vunpack.c.l.b16 %v388
      %v485 = vunpack.c.l.b16 %v389
      %v486 = vunpack.c.l.b16 %v390
      %v487 = vunpack.c.l.b16 %v391
      %v488 = vunpack.c.l.b16 %v392
      %v489 = vunpack.c.l.b16 %v393
      %v490 = vunpack.c.l.b16 %v394
      %v491 = vunpack.c.l.b16 %v395
      %v492 = vunpack.c.l.b16 %v396
      %v493 = vunpack.c.l.b16 %v397
      %v494 = vunpack.c.l.b16 %v398
      %v495 = vunpack.c.l.b16 %v399
      %v496 = vunpack.c.l.b16 %v400
      %v497 = vunpack.c.l.b16 %v401
      %v498 = vunpack.c.l.b16 %v402
      %v499 = vunpack.c.l.b16 %v403
      %v500 = vunpack.c.l.b16 %v404
      %v501 = vpack.c.b16 %v454, %v453
      %v502 = vpack.c.b16 %v456, %v455
      %v503 = vpack.c.b16 %v458, %v457
      %v504 = vpack.c.b16 %v460, %v459
      %v505 = vpack.c.b16 %v462, %v461
      %v506 = vpack.c.b16 %v464, %v463
      %v507 = vpack.c.b16 %v466, %v465
      %v508 = vpack.c.b16 %v468, %v467
      %v509 = vpack.c.b16 %v470, %v469
      %v510 = vpack.c.b16 %v472, %v471
      %v511 = vpack.c.b16 %v474, %v473
      %v512 = vpack.c.b16 %v476, %v475
      %v513 = vpack.c.b16 %v478, %v477
      %v514 = vpack.c.b16 %v480, %v479
      %v515 = vpack.c.b16 %v482, %v481
      %v516 = vpack.c.b16 %v484, %v483
      %v517 = vpack.c.b16 %v486, %v485
      %v518 = vpack.c.b16 %v488, %v487
      %v519 = vpack.c.b16 %v490, %v489
      %v520 = vpack.c.b16 %v492, %v491
      %v521 = vpack.c.b16 %v494, %v493
      %v522 = vpack.c.b16 %v496, %v495
      %v523 = vpack.c.b16 %v498, %v497
      %v524 = vpack.c.b16 %v500, %v499
      %549 = vmatprep.subr.bf16.mxu0 0
      %550 = vmatpush1.bf16.msra.mxu0 %v508
      %551 = vmatprep.subr.bf16.mxu0 0
      %552 = vmatpush1.bf16.msra.mxu0 %v507
      %553 = vmatprep.subr.bf16.mxu0 0
      %554 = vmatpush1.bf16.msra.mxu0 %v506
      %555 = vmatprep.subr.bf16.mxu0 0
      %556 = vmatpush1.bf16.msra.mxu0 %v505
      %557 = vmatprep.subr.bf16.mxu0 0
      %558 = vmatpush1.bf16.msra.mxu0 %v504
      %559 = vmatprep.subr.bf16.mxu0 0
      %560 = vmatpush1.bf16.msra.mxu0 %v503
      %561 = vmatprep.subr.bf16.mxu0 0
      %562 = vmatpush1.bf16.msra.mxu0 %v502
      %563 = vmatprep.subr.bf16.mxu0 0
      %564 = vmatpush1.bf16.msra.mxu0 %v501
      %565 = vmatprep.subr.bf16.mxu0 0
      %566 = vmatpush2.bf16.msra.mxu0 %v516
      %567 = vmatprep.subr.bf16.mxu0 0
      %568 = vmatpush2.bf16.msra.mxu0 %v515
      %569 = vmatprep.subr.bf16.mxu0 0
      %570 = vmatpush2.bf16.msra.mxu0 %v514
      %571 = vmatprep.subr.bf16.mxu0 0
      %572 = vmatpush2.bf16.msra.mxu0 %v513
      %573 = vmatprep.subr.bf16.mxu0 0
      %574 = vmatpush2.bf16.msra.mxu0 %v512
      %575 = vmatprep.subr.bf16.mxu0 0
      %576 = vmatpush2.bf16.msra.mxu0 %v511
      %577 = vmatprep.subr.bf16.mxu0 0
      %578 = vmatpush2.bf16.msra.mxu0 %v510
      %579 = vmatprep.subr.bf16.mxu0 0
      %580 = vmatpush2.bf16.msra.mxu0 %v509
      %581 = vmatprep.mubr.bf16.mxu0 %v286
      %582 = vmatmul.mubr.bf16.gmra.mxu0 %v285
      %v583 = vpop.f32.mrf.mxu0
      %v584 = vadd.f32 0.0, %v583
      %v585 = vpop.f32.mrf.mxu0
      %v586 = vpop.f32.mrf.mxu0
      %v587 = vadd.f32 0.0, %v586
      %v588 = vpop.f32.mrf.mxu0
      %589 = vmatprep.mubr.bf16.mxu0 %v289
      %590 = vmatmul.mubr.bf16.gmra.mxu0 %v288
      %v591 = vpop.f32.mrf.mxu0
      %v592 = vadd.f32 0.0, %v591
      %v593 = vpop.f32.mrf.mxu0
      %v594 = vpop.f32.mrf.mxu0
      %v595 = vadd.f32 0.0, %v594
      %v596 = vpop.f32.mrf.mxu0
      %597 = vmatprep.mubr.bf16.mxu0 %v292
      %598 = vmatmul.mubr.bf16.gmra.mxu0 %v291
      %v599 = vpop.f32.mrf.mxu0
      %v600 = vadd.f32 0.0, %v599
      %v601 = vpop.f32.mrf.mxu0
      %v602 = vpop.f32.mrf.mxu0
      %v603 = vadd.f32 0.0, %v602
      %v604 = vpop.f32.mrf.mxu0
      %605 = vmatprep.mubr.bf16.mxu0 %v295
      %606 = vmatmul.mubr.bf16.gmra.mxu0 %v294
      %v607 = vpop.f32.mrf.mxu0
      %v608 = vadd.f32 0.0, %v607
      %v609 = vpop.f32.mrf.mxu0
      %v610 = vpop.f32.mrf.mxu0
      %v611 = vadd.f32 0.0, %v610
      %v612 = vpop.f32.mrf.mxu0
      %613 = vmatprep.mubr.bf16.mxu0 %v298
      %614 = vmatmul.mubr.bf16.gmra.mxu0 %v297
      %v615 = vpop.f32.mrf.mxu0
      %v616 = vadd.f32 0.0, %v615
      %v617 = vpop.f32.mrf.mxu0
      %v618 = vpop.f32.mrf.mxu0
      %v619 = vadd.f32 0.0, %v618
      %v620 = vpop.f32.mrf.mxu0
      %621 = vmatprep.mubr.bf16.mxu0 %v301
      %622 = vmatmul.mubr.bf16.gmra.mxu0 %v300
      %v623 = vpop.f32.mrf.mxu0
      %v624 = vadd.f32 0.0, %v623
      %v625 = vpop.f32.mrf.mxu0
      %v626 = vpop.f32.mrf.mxu0
      %v627 = vadd.f32 0.0, %v626
      %v628 = vpop.f32.mrf.mxu0
      %629 = vmatprep.mubr.bf16.mxu0 %v304
      %630 = vmatmul.mubr.bf16.gmra.mxu0 %v303
      %v631 = vpop.f32.mrf.mxu0
      %v632 = vadd.f32 0.0, %v631
      %v633 = vpop.f32.mrf.mxu0
      %v634 = vpop.f32.mrf.mxu0
      %v635 = vadd.f32 0.0, %v634
      %v636 = vpop.f32.mrf.mxu0
      %637 = vmatprep.mubr.bf16.mxu0 %v307
      %638 = vmatmul.mubr.bf16.gmra.mxu0 %v306
      %v639 = vpop.f32.mrf.mxu0
      %v640 = vadd.f32 0.0, %v639
      %v641 = vpop.f32.mrf.mxu0
      %v642 = vpop.f32.mrf.mxu0
      %v643 = vadd.f32 0.0, %v642
      %v644 = vpop.f32.mrf.mxu0
      %645 = vdwg.mxu0
      %646 = vmatprep.subr.bf16.mxu0 0
      %647 = vmatpush1.bf16.msra.mxu0 %v524
      %648 = vmatprep.subr.bf16.mxu0 0
      %649 = vmatpush1.bf16.msra.mxu0 %v523
      %650 = vmatprep.subr.bf16.mxu0 0
      %651 = vmatpush1.bf16.msra.mxu0 %v522
      %652 = vmatprep.subr.bf16.mxu0 0
      %653 = vmatpush1.bf16.msra.mxu0 %v521
      %654 = vmatprep.subr.bf16.mxu0 0
      %655 = vmatpush1.bf16.msra.mxu0 %v520
      %656 = vmatprep.subr.bf16.mxu0 0
      %657 = vmatpush1.bf16.msra.mxu0 %v519
      %658 = vmatprep.subr.bf16.mxu0 0
      %659 = vmatpush1.bf16.msra.mxu0 %v518
      %660 = vmatprep.subr.bf16.mxu0 0
      %661 = vmatpush1.bf16.msra.mxu0 %v517
      %662 = vmatprep.subr.bf16.mxu0 0
      %663 = vmatpush2.bf16.msra.mxu0 0
      %664 = vmatprep.subr.bf16.mxu0 0
      %665 = vmatpush2.bf16.msra.mxu0 0
      %666 = vmatprep.subr.bf16.mxu0 0
      %667 = vmatpush2.bf16.msra.mxu0 0
      %668 = vmatprep.subr.bf16.mxu0 0
      %669 = vmatpush2.bf16.msra.mxu0 0
      %670 = vmatprep.subr.bf16.mxu0 0
      %671 = vmatpush2.bf16.msra.mxu0 0
      %672 = vmatprep.subr.bf16.mxu0 0
      %673 = vmatpush2.bf16.msra.mxu0 0
      %674 = vmatprep.subr.bf16.mxu0 0
      %675 = vmatpush2.bf16.msra.mxu0 0
      %676 = vmatprep.subr.bf16.mxu0 0
      %677 = vmatpush2.bf16.msra.mxu0 0
      %678 = vmatprep.mubr.bf16.mxu0 0
      %679 = vmatmul.mubr.bf16.gmra.mxu0 %v287
      %v680 = vpop.f32.mrf.mxu0
      %v681 = vadd.f32 %v584, %v680
      %v682 = vpop.f32.mrf.mxu0
      %v683 = vpop.f32.mrf.mxu0
      %v684 = vadd.f32 %v587, %v683
      %v685 = vpop.f32.mrf.mxu0
      %686 = vmatprep.mubr.bf16.mxu0 0
      %687 = vmatmul.mubr.bf16.gmra.mxu0 %v290
      %v688 = vpop.f32.mrf.mxu0
      %v689 = vadd.f32 %v592, %v688
      %v690 = vpop.f32.mrf.mxu0
      %v691 = vpop.f32.mrf.mxu0
      %v692 = vadd.f32 %v595, %v691
      %v693 = vpop.f32.mrf.mxu0
      %694 = vmatprep.mubr.bf16.mxu0 0
      %695 = vmatmul.mubr.bf16.gmra.mxu0 %v293
      %v696 = vpop.f32.mrf.mxu0
      %v697 = vadd.f32 %v600, %v696
      %v698 = vpop.f32.mrf.mxu0
      %v699 = vpop.f32.mrf.mxu0
      %v700 = vadd.f32 %v603, %v699
      %v701 = vpop.f32.mrf.mxu0
      %702 = vmatprep.mubr.bf16.mxu0 0
      %703 = vmatmul.mubr.bf16.gmra.mxu0 %v296
      %v704 = vpop.f32.mrf.mxu0
      %v705 = vadd.f32 %v608, %v704
      %v706 = vpop.f32.mrf.mxu0
      %v707 = vpop.f32.mrf.mxu0
      %v708 = vadd.f32 %v611, %v707
      %v709 = vpop.f32.mrf.mxu0
      %710 = vmatprep.mubr.bf16.mxu0 0
      %711 = vmatmul.mubr.bf16.gmra.mxu0 %v299
      %v712 = vpop.f32.mrf.mxu0
      %v713 = vadd.f32 %v616, %v712
      %v714 = vpop.f32.mrf.mxu0
      %v715 = vpop.f32.mrf.mxu0
      %v716 = vadd.f32 %v619, %v715
      %v717 = vpop.f32.mrf.mxu0
      %718 = vmatprep.mubr.bf16.mxu0 0
      %719 = vmatmul.mubr.bf16.gmra.mxu0 %v302
      %v720 = vpop.f32.mrf.mxu0
      %v721 = vadd.f32 %v624, %v720
      %v722 = vpop.f32.mrf.mxu0
      %v723 = vpop.f32.mrf.mxu0
      %v724 = vadd.f32 %v627, %v723
      %v725 = vpop.f32.mrf.mxu0
      %726 = vmatprep.mubr.bf16.mxu0 0
      %727 = vmatmul.mubr.bf16.gmra.mxu0 %v305
      %v728 = vpop.f32.mrf.mxu0
      %v729 = vadd.f32 %v632, %v728
      %v730 = vpop.f32.mrf.mxu0
      %v731 = vpop.f32.mrf.mxu0
      %v732 = vadd.f32 %v635, %v731
      %v733 = vpop.f32.mrf.mxu0
      %734 = vmatprep.mubr.bf16.mxu0 0
      %735 = vmatmul.mubr.bf16.gmra.mxu0 %v308
      %v736 = vpop.f32.mrf.mxu0
      %v737 = vadd.f32 %v640, %v736
      %v738 = vpop.f32.mrf.mxu0
      %v739 = vpop.f32.mrf.mxu0
      %v740 = vadd.f32 %v643, %v739
      %v741 = vpop.f32.mrf.mxu0
      %742 = vdwg.mxu0
      %v791 = vunpack.c.l.b16 %v309
      %v792 = vunpack.c.l.b16 %v310
      %v793 = vunpack.c.l.b16 %v311
      %v794 = vunpack.c.l.b16 %v312
      %v795 = vunpack.c.l.b16 %v313
      %v796 = vunpack.c.l.b16 %v314
      %v797 = vunpack.c.l.b16 %v315
      %v798 = vunpack.c.l.b16 %v316
      %v799 = vunpack.c.l.b16 %v317
      %v800 = vunpack.c.l.b16 %v318
      %v801 = vunpack.c.l.b16 %v319
      %v802 = vunpack.c.l.b16 %v320
      %v803 = vunpack.c.l.b16 %v321
      %v804 = vunpack.c.l.b16 %v322
      %v805 = vunpack.c.l.b16 %v323
      %v806 = vunpack.c.l.b16 %v324
      %v807 = vunpack.c.l.b16 %v325
      %v808 = vunpack.c.l.b16 %v326
      %v809 = vunpack.c.l.b16 %v327
      %v810 = vunpack.c.l.b16 %v328
      %v811 = vunpack.c.l.b16 %v329
      %v812 = vunpack.c.l.b16 %v330
      %v813 = vunpack.c.l.b16 %v331
      %v814 = vunpack.c.l.b16 %v332
      %v815 = vunpack.c.l.b16 %v333
      %v816 = vunpack.c.l.b16 %v334
      %v817 = vunpack.c.l.b16 %v335
      %v818 = vunpack.c.l.b16 %v336
      %v819 = vunpack.c.l.b16 %v337
      %v820 = vunpack.c.l.b16 %v338
      %v821 = vunpack.c.l.b16 %v339
      %v822 = vunpack.c.l.b16 %v340
      %v823 = vunpack.c.l.b16 %v341
      %v824 = vunpack.c.l.b16 %v342
      %v825 = vunpack.c.l.b16 %v343
      %v826 = vunpack.c.l.b16 %v344
      %v827 = vunpack.c.l.b16 %v345
      %v828 = vunpack.c.l.b16 %v346
      %v829 = vunpack.c.l.b16 %v347
      %v830 = vunpack.c.l.b16 %v348
      %v831 = vunpack.c.l.b16 %v349
      %v832 = vunpack.c.l.b16 %v350
      %v833 = vunpack.c.l.b16 %v351
      %v834 = vunpack.c.l.b16 %v352
      %v835 = vunpack.c.l.b16 %v353
      %v836 = vunpack.c.l.b16 %v354
      %v837 = vunpack.c.l.b16 %v355
      %v838 = vunpack.c.l.b16 %v356
      %v839 = vpack.c.b16 %v792, %v791
      %v840 = vpack.c.b16 %v794, %v793
      %v841 = vpack.c.b16 %v796, %v795
      %v842 = vpack.c.b16 %v798, %v797
      %v843 = vpack.c.b16 %v800, %v799
      %v844 = vpack.c.b16 %v802, %v801
      %v845 = vpack.c.b16 %v804, %v803
      %v846 = vpack.c.b16 %v806, %v805
      %v847 = vpack.c.b16 %v808, %v807
      %v848 = vpack.c.b16 %v810, %v809
      %v849 = vpack.c.b16 %v812, %v811
      %v850 = vpack.c.b16 %v814, %v813
      %v851 = vpack.c.b16 %v816, %v815
      %v852 = vpack.c.b16 %v818, %v817
      %v853 = vpack.c.b16 %v820, %v819
      %v854 = vpack.c.b16 %v822, %v821
      %v855 = vpack.c.b16 %v824, %v823
      %v856 = vpack.c.b16 %v826, %v825
      %v857 = vpack.c.b16 %v828, %v827
      %v858 = vpack.c.b16 %v830, %v829
      %v859 = vpack.c.b16 %v832, %v831
      %v860 = vpack.c.b16 %v834, %v833
      %v861 = vpack.c.b16 %v836, %v835
      %v862 = vpack.c.b16 %v838, %v837
      %887 = vmatprep.subr.bf16.mxu0 0
      %888 = vmatpush1.bf16.msra.mxu0 %v846
      %889 = vmatprep.subr.bf16.mxu0 0
      %890 = vmatpush1.bf16.msra.mxu0 %v845
      %891 = vmatprep.subr.bf16.mxu0 0
      %892 = vmatpush1.bf16.msra.mxu0 %v844
      %893 = vmatprep.subr.bf16.mxu0 0
      %894 = vmatpush1.bf16.msra.mxu0 %v843
      %895 = vmatprep.subr.bf16.mxu0 0
      %896 = vmatpush1.bf16.msra.mxu0 %v842
      %897 = vmatprep.subr.bf16.mxu0 0
      %898 = vmatpush1.bf16.msra.mxu0 %v841
      %899 = vmatprep.subr.bf16.mxu0 0
      %900 = vmatpush1.bf16.msra.mxu0 %v840
      %901 = vmatprep.subr.bf16.mxu0 0
      %902 = vmatpush1.bf16.msra.mxu0 %v839
      %903 = vmatprep.subr.bf16.mxu0 0
      %904 = vmatpush2.bf16.msra.mxu0 %v854
      %905 = vmatprep.subr.bf16.mxu0 0
      %906 = vmatpush2.bf16.msra.mxu0 %v853
      %907 = vmatprep.subr.bf16.mxu0 0
      %908 = vmatpush2.bf16.msra.mxu0 %v852
      %909 = vmatprep.subr.bf16.mxu0 0
      %910 = vmatpush2.bf16.msra.mxu0 %v851
      %911 = vmatprep.subr.bf16.mxu0 0
      %912 = vmatpush2.bf16.msra.mxu0 %v850
      %913 = vmatprep.subr.bf16.mxu0 0
      %914 = vmatpush2.bf16.msra.mxu0 %v849
      %915 = vmatprep.subr.bf16.mxu0 0
      %916 = vmatpush2.bf16.msra.mxu0 %v848
      %917 = vmatprep.subr.bf16.mxu0 0
      %918 = vmatpush2.bf16.msra.mxu0 %v847
      %919 = vmatprep.mubr.bf16.mxu0 %v286
      %920 = vmatmul.mubr.bf16.gmra.mxu0 %v285
      %v921 = vpop.f32.mrf.mxu0
      %v922 = vadd.f32 %v681, %v921
      %v923 = vpop.f32.mrf.mxu0
      %v924 = vpop.f32.mrf.mxu0
      %v925 = vadd.f32 %v684, %v924
      %v926 = vpop.f32.mrf.mxu0
      %927 = vmatprep.mubr.bf16.mxu0 %v289
      %928 = vmatmul.mubr.bf16.gmra.mxu0 %v288
      %v929 = vpop.f32.mrf.mxu0
      %v930 = vadd.f32 %v689, %v929
      %v931 = vpop.f32.mrf.mxu0
      %v932 = vpop.f32.mrf.mxu0
      %v933 = vadd.f32 %v692, %v932
      %v934 = vpop.f32.mrf.mxu0
      %935 = vmatprep.mubr.bf16.mxu0 %v292
      %936 = vmatmul.mubr.bf16.gmra.mxu0 %v291
      %v937 = vpop.f32.mrf.mxu0
      %v938 = vadd.f32 %v697, %v937
      %v939 = vpop.f32.mrf.mxu0
      %v940 = vpop.f32.mrf.mxu0
      %v941 = vadd.f32 %v700, %v940
      %v942 = vpop.f32.mrf.mxu0
      %943 = vmatprep.mubr.bf16.mxu0 %v295
      %944 = vmatmul.mubr.bf16.gmra.mxu0 %v294
      %v945 = vpop.f32.mrf.mxu0
      %v946 = vadd.f32 %v705, %v945
      %v947 = vpop.f32.mrf.mxu0
      %v948 = vpop.f32.mrf.mxu0
      %v949 = vadd.f32 %v708, %v948
      %v950 = vpop.f32.mrf.mxu0
      %951 = vmatprep.mubr.bf16.mxu0 %v298
      %952 = vmatmul.mubr.bf16.gmra.mxu0 %v297
      %v953 = vpop.f32.mrf.mxu0
      %v954 = vadd.f32 %v713, %v953
      %v955 = vpop.f32.mrf.mxu0
      %v956 = vpop.f32.mrf.mxu0
      %v957 = vadd.f32 %v716, %v956
      %v958 = vpop.f32.mrf.mxu0
      %959 = vmatprep.mubr.bf16.mxu0 %v301
      %960 = vmatmul.mubr.bf16.gmra.mxu0 %v300
      %v961 = vpop.f32.mrf.mxu0
      %v962 = vadd.f32 %v721, %v961
      %v963 = vpop.f32.mrf.mxu0
      %v964 = vpop.f32.mrf.mxu0
      %v965 = vadd.f32 %v724, %v964
      %v966 = vpop.f32.mrf.mxu0
      %967 = vmatprep.mubr.bf16.mxu0 %v304
      %968 = vmatmul.mubr.bf16.gmra.mxu0 %v303
      %v969 = vpop.f32.mrf.mxu0
      %v970 = vadd.f32 %v729, %v969
      %v971 = vpop.f32.mrf.mxu0
      %v972 = vpop.f32.mrf.mxu0
      %v973 = vadd.f32 %v732, %v972
      %v974 = vpop.f32.mrf.mxu0
      %975 = vmatprep.mubr.bf16.mxu0 %v307
      %976 = vmatmul.mubr.bf16.gmra.mxu0 %v306
      %v977 = vpop.f32.mrf.mxu0
      %v978 = vadd.f32 %v737, %v977
      %v979 = vpop.f32.mrf.mxu0
      %v980 = vpop.f32.mrf.mxu0
      %v981 = vadd.f32 %v740, %v980
      %v982 = vpop.f32.mrf.mxu0
      %983 = vdwg.mxu0
      %984 = vmatprep.subr.bf16.mxu0 0
      %985 = vmatpush1.bf16.msra.mxu0 %v862
      %986 = vmatprep.subr.bf16.mxu0 0
      %987 = vmatpush1.bf16.msra.mxu0 %v861
      %988 = vmatprep.subr.bf16.mxu0 0
      %989 = vmatpush1.bf16.msra.mxu0 %v860
      %990 = vmatprep.subr.bf16.mxu0 0
      %991 = vmatpush1.bf16.msra.mxu0 %v859
      %992 = vmatprep.subr.bf16.mxu0 0
      %993 = vmatpush1.bf16.msra.mxu0 %v858
      %994 = vmatprep.subr.bf16.mxu0 0
      %995 = vmatpush1.bf16.msra.mxu0 %v857
      %996 = vmatprep.subr.bf16.mxu0 0
      %997 = vmatpush1.bf16.msra.mxu0 %v856
      %998 = vmatprep.subr.bf16.mxu0 0
      %999 = vmatpush1.bf16.msra.mxu0 %v855
      %1000 = vmatprep.subr.bf16.mxu0 0
      %1001 = vmatpush2.bf16.msra.mxu0 0
      %1002 = vmatprep.subr.bf16.mxu0 0
      %1003 = vmatpush2.bf16.msra.mxu0 0
      %1004 = vmatprep.subr.bf16.mxu0 0
      %1005 = vmatpush2.bf16.msra.mxu0 0
      %1006 = vmatprep.subr.bf16.mxu0 0
      %1007 = vmatpush2.bf16.msra.mxu0 0
      %1008 = vmatprep.subr.bf16.mxu0 0
      %1009 = vmatpush2.bf16.msra.mxu0 0
      %1010 = vmatprep.subr.bf16.mxu0 0
      %1011 = vmatpush2.bf16.msra.mxu0 0
      %1012 = vmatprep.subr.bf16.mxu0 0
      %1013 = vmatpush2.bf16.msra.mxu0 0
      %1014 = vmatprep.subr.bf16.mxu0 0
      %1015 = vmatpush2.bf16.msra.mxu0 0
      %1016 = vmatprep.mubr.bf16.mxu0 0
      %1017 = vmatmul.mubr.bf16.gmra.mxu0 %v287
      %v1018 = vpop.f32.mrf.mxu0
      %v1019 = vadd.f32 %v922, %v1018
      %v1020 = vpop.f32.mrf.mxu0
      %v1021 = vpop.f32.mrf.mxu0
      %v1022 = vadd.f32 %v925, %v1021
      %v1023 = vpop.f32.mrf.mxu0
      %1024 = vmatprep.mubr.bf16.mxu0 0
      %1025 = vmatmul.mubr.bf16.gmra.mxu0 %v290
      %v1026 = vpop.f32.mrf.mxu0
      %v1027 = vadd.f32 %v930, %v1026
      %v1028 = vpop.f32.mrf.mxu0
      %v1029 = vpop.f32.mrf.mxu0
      %v1030 = vadd.f32 %v933, %v1029
      %v1031 = vpop.f32.mrf.mxu0
      %1032 = vmatprep.mubr.bf16.mxu0 0
      %1033 = vmatmul.mubr.bf16.gmra.mxu0 %v293
      %v1034 = vpop.f32.mrf.mxu0
      %v1035 = vadd.f32 %v938, %v1034
      %v1036 = vpop.f32.mrf.mxu0
      %v1037 = vpop.f32.mrf.mxu0
      %v1038 = vadd.f32 %v941, %v1037
      %v1039 = vpop.f32.mrf.mxu0
      %1040 = vmatprep.mubr.bf16.mxu0 0
      %1041 = vmatmul.mubr.bf16.gmra.mxu0 %v296
      %v1042 = vpop.f32.mrf.mxu0
      %v1043 = vadd.f32 %v946, %v1042
      %v1044 = vpop.f32.mrf.mxu0
      %v1045 = vpop.f32.mrf.mxu0
      %v1046 = vadd.f32 %v949, %v1045
      %v1047 = vpop.f32.mrf.mxu0
      %1048 = vmatprep.mubr.bf16.mxu0 0
      %1049 = vmatmul.mubr.bf16.gmra.mxu0 %v299
      %v1050 = vpop.f32.mrf.mxu0
      %v1051 = vadd.f32 %v954, %v1050
      %v1052 = vpop.f32.mrf.mxu0
      %v1053 = vpop.f32.mrf.mxu0
      %v1054 = vadd.f32 %v957, %v1053
      %v1055 = vpop.f32.mrf.mxu0
      %1056 = vmatprep.mubr.bf16.mxu0 0
      %1057 = vmatmul.mubr.bf16.gmra.mxu0 %v302
      %v1058 = vpop.f32.mrf.mxu0
      %v1059 = vadd.f32 %v962, %v1058
      %v1060 = vpop.f32.mrf.mxu0
      %v1061 = vpop.f32.mrf.mxu0
      %v1062 = vadd.f32 %v965, %v1061
      %v1063 = vpop.f32.mrf.mxu0
      %1064 = vmatprep.mubr.bf16.mxu0 0
      %1065 = vmatmul.mubr.bf16.gmra.mxu0 %v305
      %v1066 = vpop.f32.mrf.mxu0
      %v1067 = vadd.f32 %v970, %v1066
      %v1068 = vpop.f32.mrf.mxu0
      %v1069 = vpop.f32.mrf.mxu0
      %v1070 = vadd.f32 %v973, %v1069
      %v1071 = vpop.f32.mrf.mxu0
      %1072 = vmatprep.mubr.bf16.mxu0 0
      %1073 = vmatmul.mubr.bf16.gmra.mxu0 %v308
      %v1074 = vpop.f32.mrf.mxu0
      %v1075 = vadd.f32 %v978, %v1074
      %v1076 = vpop.f32.mrf.mxu0
      %v1077 = vpop.f32.mrf.mxu0
      %v1078 = vadd.f32 %v981, %v1077
      %v1079 = vpop.f32.mrf.mxu0
      %1080 = vdwg.mxu0
      %v1081 = vmax.f32 %v1019, 0.0
      %v1082 = vmax.f32 %v1022, 0.0
      %v1083 = vmax.f32 %v1027, 0.0
      %v1084 = vmax.f32 %v1030, 0.0
      %v1085 = vmax.f32 %v1035, 0.0
      %v1086 = vmax.f32 %v1038, 0.0
      %v1087 = vmax.f32 %v1043, 0.0
      %v1088 = vmax.f32 %v1046, 0.0
      %v1089 = vmax.f32 %v1051, 0.0
      %v1090 = vmax.f32 %v1054, 0.0
      %v1091 = vmax.f32 %v1059, 0.0
      %v1092 = vmax.f32 %v1062, 0.0
      %v1093 = vmax.f32 %v1067, 0.0
      %v1094 = vmax.f32 %v1070, 0.0
      %v1095 = vmax.f32 %v1075, 0.0
      %v1096 = vmax.f32 %v1078, 0.0
      %v1097 = vpack.c.bf16 %v1082, %v1081
      %v1098 = vpack.c.bf16 %v1084, %v1083
      %v1099 = vpack.c.bf16 %v1086, %v1085
      %v1100 = vpack.c.bf16 %v1088, %v1087
      %v1101 = vpack.c.bf16 %v1090, %v1089
      %v1102 = vpack.c.bf16 %v1092, %v1091
      %v1103 = vpack.c.bf16 %v1094, %v1093
      %v1104 = vpack.c.bf16 %v1096, %v1095
      %v1105 = vunpack.c.l.bf16 %v1097
      %v1106 = vunpack.c.h.bf16 %v1097
      %v1107 = vunpack.c.l.bf16 %v1098
      %v1108 = vunpack.c.h.bf16 %v1098
      %v1109 = vunpack.c.l.bf16 %v1099
      %v1110 = vunpack.c.h.bf16 %v1099
      %v1111 = vunpack.c.l.bf16 %v1100
      %v1112 = vunpack.c.h.bf16 %v1100
      %v1113 = vunpack.c.l.bf16 %v1101
      %v1114 = vunpack.c.h.bf16 %v1101
      %v1115 = vunpack.c.l.bf16 %v1102
      %v1116 = vunpack.c.h.bf16 %v1102
      %v1117 = vunpack.c.l.bf16 %v1103
      %v1118 = vunpack.c.h.bf16 %v1103
      %v1119 = vunpack.c.l.bf16 %v1104
      %v1120 = vunpack.c.h.bf16 %v1104
      %v1121 = vsub.f32 %v1081, %v1105
      %v1122 = vsub.f32 %v1082, %v1106
      %v1123 = vsub.f32 %v1083, %v1107
      %v1124 = vsub.f32 %v1084, %v1108
      %v1125 = vsub.f32 %v1085, %v1109
      %v1126 = vsub.f32 %v1086, %v1110
      %v1127 = vsub.f32 %v1087, %v1111
      %v1128 = vsub.f32 %v1088, %v1112
      %v1129 = vsub.f32 %v1089, %v1113
      %v1130 = vsub.f32 %v1090, %v1114
      %v1131 = vsub.f32 %v1091, %v1115
      %v1132 = vsub.f32 %v1092, %v1116
      %v1133 = vsub.f32 %v1093, %v1117
      %v1134 = vsub.f32 %v1094, %v1118
      %v1135 = vsub.f32 %v1095, %v1119
      %v1136 = vsub.f32 %v1096, %v1120
      %v1137 = vpack.c.bf16 %v1122, %v1121
      %v1138 = vpack.c.bf16 %v1124, %v1123
      %v1139 = vpack.c.bf16 %v1126, %v1125
      %v1140 = vpack.c.bf16 %v1128, %v1127
      %v1141 = vpack.c.bf16 %v1130, %v1129
      %v1142 = vpack.c.bf16 %v1132, %v1131
      %v1143 = vpack.c.bf16 %v1134, %v1133
      %v1144 = vpack.c.bf16 %v1136, %v1135
      %v1145 = vld [vmem:[%s2] sm:$0xf]
      %v1146 = vld [vmem:[%s2 + $0x4] sm:$0xf]
      %v1147 = vld [vmem:[%s2 + $0x8] sm:$0xf]
      %v1148 = vld [vmem:[%s2 + $0xc] sm:$0xf]
      %v1149 = vld [vmem:[%s2 + $0x10] sm:$0xf]
      %v1150 = vld [vmem:[%s2 + $0x14] sm:$0xf]
      %v1151 = vld [vmem:[%s2 + $0x18] sm:$0xf]
      %v1152 = vld [vmem:[%s2 + $0x1c] sm:$0xf]
      %v1153 = vld [vmem:[%s2 + $0x20] sm:$0xf]
      %v1154 = vld [vmem:[%s2 + $0x24] sm:$0xf]
      %v1155 = vld [vmem:[%s2 + $0x28] sm:$0xf]
      %v1156 = vld [vmem:[%s2 + $0x2c] sm:$0xf]
      %v1157 = vld [vmem:[%s2 + $0x30] sm:$0xf]
      %v1158 = vld [vmem:[%s2 + $0x34] sm:$0xf]
      %v1159 = vld [vmem:[%s2 + $0x38] sm:$0xf]
      %v1160 = vld [vmem:[%s2 + $0x3c] sm:$0xf]
      %v1161 = vld [vmem:[%s3] sm:$0xf]
      %v1162 = vld [vmem:[%s3 + $0x4] sm:$0xf]
      %v1163 = vld [vmem:[%s3 + $0x8] sm:$0xf]
      %v1164 = vld [vmem:[%s3 + $0xc] sm:$0xf]
      %v1165 = vld [vmem:[%s3 + $0x10] sm:$0xf]
      %v1166 = vld [vmem:[%s3 + $0x14] sm:$0xf]
      %v1167 = vld [vmem:[%s3 + $0x18] sm:$0xf]
      %v1168 = vld [vmem:[%s3 + $0x1c] sm:$0xf]
      %v1169 = vld [vmem:[%s3 + $0x20] sm:$0xf]
      %v1170 = vld [vmem:[%s3 + $0x24] sm:$0xf]
      %v1171 = vld [vmem:[%s3 + $0x28] sm:$0xf]
      %v1172 = vld [vmem:[%s3 + $0x2c] sm:$0xf]
      %v1173 = vld [vmem:[%s3 + $0x30] sm:$0xf]
      %v1174 = vld [vmem:[%s3 + $0x34] sm:$0xf]
      %v1175 = vld [vmem:[%s3 + $0x38] sm:$0xf]
      %v1176 = vld [vmem:[%s3 + $0x3c] sm:$0xf]
      %v1193 = vunpack.c.l.b16 %v1161
      %v1194 = vunpack.c.l.b16 %v1162
      %v1195 = vunpack.c.l.b16 %v1163
      %v1196 = vunpack.c.l.b16 %v1164
      %v1197 = vunpack.c.l.b16 %v1165
      %v1198 = vunpack.c.l.b16 %v1166
      %v1199 = vunpack.c.l.b16 %v1167
      %v1200 = vunpack.c.l.b16 %v1168
      %v1201 = vunpack.c.l.b16 %v1169
      %v1202 = vunpack.c.l.b16 %v1170
      %v1203 = vunpack.c.l.b16 %v1171
      %v1204 = vunpack.c.l.b16 %v1172
      %v1205 = vunpack.c.l.b16 %v1173
      %v1206 = vunpack.c.l.b16 %v1174
      %v1207 = vunpack.c.l.b16 %v1175
      %v1208 = vunpack.c.l.b16 %v1176
      %v1209 = vpack.c.b16 %v1194, %v1193
      %v1210 = vpack.c.b16 %v1196, %v1195
      %v1211 = vpack.c.b16 %v1198, %v1197
      %v1212 = vpack.c.b16 %v1200, %v1199
      %v1213 = vpack.c.b16 %v1202, %v1201
      %v1214 = vpack.c.b16 %v1204, %v1203
      %v1215 = vpack.c.b16 %v1206, %v1205
      %v1216 = vpack.c.b16 %v1208, %v1207
      %1225 = vmatprep.subr.bf16.mxu0 0
      %1226 = vmatpush1.bf16.msra.mxu0 %v1216
      %1227 = vmatprep.subr.bf16.mxu0 0
      %1228 = vmatpush1.bf16.msra.mxu0 %v1215
      %1229 = vmatprep.subr.bf16.mxu0 0
      %1230 = vmatpush1.bf16.msra.mxu0 %v1214
      %1231 = vmatprep.subr.bf16.mxu0 0
      %1232 = vmatpush1.bf16.msra.mxu0 %v1213
      %1233 = vmatprep.subr.bf16.mxu0 0
      %1234 = vmatpush1.bf16.msra.mxu0 %v1212
      %1235 = vmatprep.subr.bf16.mxu0 0
      %1236 = vmatpush1.bf16.msra.mxu0 %v1211
      %1237 = vmatprep.subr.bf16.mxu0 0
      %1238 = vmatpush1.bf16.msra.mxu0 %v1210
      %1239 = vmatprep.subr.bf16.mxu0 0
      %1240 = vmatpush1.bf16.msra.mxu0 %v1209
      %1241 = vmatprep.subr.bf16.mxu0 0
      %1242 = vmatpush2.bf16.msra.mxu0 0
      %1243 = vmatprep.subr.bf16.mxu0 0
      %1244 = vmatpush2.bf16.msra.mxu0 0
      %1245 = vmatprep.subr.bf16.mxu0 0
      %1246 = vmatpush2.bf16.msra.mxu0 0
      %1247 = vmatprep.subr.bf16.mxu0 0
      %1248 = vmatpush2.bf16.msra.mxu0 0
      %1249 = vmatprep.subr.bf16.mxu0 0
      %1250 = vmatpush2.bf16.msra.mxu0 0
      %1251 = vmatprep.subr.bf16.mxu0 0
      %1252 = vmatpush2.bf16.msra.mxu0 0
      %1253 = vmatprep.subr.bf16.mxu0 0
      %1254 = vmatpush2.bf16.msra.mxu0 0
      %1255 = vmatprep.subr.bf16.mxu0 0
      %1256 = vmatpush2.bf16.msra.mxu0 0
      %1257 = vmatprep.mubr.bf16.mxu0 0
      %1258 = vmatmul.mubr.bf16.gmra.mxu0 %v1097
      %v1259 = vpop.f32.mrf.mxu0
      %v1260 = vadd.f32 0.0, %v1259
      %v1261 = vpop.f32.mrf.mxu0
      %v1262 = vpop.f32.mrf.mxu0
      %v1263 = vadd.f32 0.0, %v1262
      %v1264 = vpop.f32.mrf.mxu0
      %1265 = vmatprep.mubr.bf16.mxu0 0
      %1266 = vmatmul.mubr.bf16.gmra.mxu0 %v1098
      %v1267 = vpop.f32.mrf.mxu0
      %v1268 = vadd.f32 0.0, %v1267
      %v1269 = vpop.f32.mrf.mxu0
      %v1270 = vpop.f32.mrf.mxu0
      %v1271 = vadd.f32 0.0, %v1270
      %v1272 = vpop.f32.mrf.mxu0
      %1273 = vmatprep.mubr.bf16.mxu0 0
      %1274 = vmatmul.mubr.bf16.gmra.mxu0 %v1099
      %v1275 = vpop.f32.mrf.mxu0
      %v1276 = vadd.f32 0.0, %v1275
      %v1277 = vpop.f32.mrf.mxu0
      %v1278 = vpop.f32.mrf.mxu0
      %v1279 = vadd.f32 0.0, %v1278
      %v1280 = vpop.f32.mrf.mxu0
      %1281 = vmatprep.mubr.bf16.mxu0 0
      %1282 = vmatmul.mubr.bf16.gmra.mxu0 %v1100
      %v1283 = vpop.f32.mrf.mxu0
      %v1284 = vadd.f32 0.0, %v1283
      %v1285 = vpop.f32.mrf.mxu0
      %v1286 = vpop.f32.mrf.mxu0
      %v1287 = vadd.f32 0.0, %v1286
      %v1288 = vpop.f32.mrf.mxu0
      %1289 = vmatprep.mubr.bf16.mxu0 0
      %1290 = vmatmul.mubr.bf16.gmra.mxu0 %v1101
      %v1291 = vpop.f32.mrf.mxu0
      %v1292 = vadd.f32 0.0, %v1291
      %v1293 = vpop.f32.mrf.mxu0
      %v1294 = vpop.f32.mrf.mxu0
      %v1295 = vadd.f32 0.0, %v1294
      %v1296 = vpop.f32.mrf.mxu0
      %1297 = vmatprep.mubr.bf16.mxu0 0
      %1298 = vmatmul.mubr.bf16.gmra.mxu0 %v1102
      %v1299 = vpop.f32.mrf.mxu0
      %v1300 = vadd.f32 0.0, %v1299
      %v1301 = vpop.f32.mrf.mxu0
      %v1302 = vpop.f32.mrf.mxu0
      %v1303 = vadd.f32 0.0, %v1302
      %v1304 = vpop.f32.mrf.mxu0
      %1305 = vmatprep.mubr.bf16.mxu0 0
      %1306 = vmatmul.mubr.bf16.gmra.mxu0 %v1103
      %v1307 = vpop.f32.mrf.mxu0
      %v1308 = vadd.f32 0.0, %v1307
      %v1309 = vpop.f32.mrf.mxu0
      %v1310 = vpop.f32.mrf.mxu0
      %v1311 = vadd.f32 0.0, %v1310
      %v1312 = vpop.f32.mrf.mxu0
      %1313 = vmatprep.mubr.bf16.mxu0 0
      %1314 = vmatmul.mubr.bf16.gmra.mxu0 %v1104
      %v1315 = vpop.f32.mrf.mxu0
      %v1316 = vadd.f32 0.0, %v1315
      %v1317 = vpop.f32.mrf.mxu0
      %v1318 = vpop.f32.mrf.mxu0
      %v1319 = vadd.f32 0.0, %v1318
      %v1320 = vpop.f32.mrf.mxu0
      %1321 = vdwg.mxu0
      %v1338 = vunpack.c.l.b16 %v1145
      %v1339 = vunpack.c.l.b16 %v1146
      %v1340 = vunpack.c.l.b16 %v1147
      %v1341 = vunpack.c.l.b16 %v1148
      %v1342 = vunpack.c.l.b16 %v1149
      %v1343 = vunpack.c.l.b16 %v1150
      %v1344 = vunpack.c.l.b16 %v1151
      %v1345 = vunpack.c.l.b16 %v1152
      %v1346 = vunpack.c.l.b16 %v1153
      %v1347 = vunpack.c.l.b16 %v1154
      %v1348 = vunpack.c.l.b16 %v1155
      %v1349 = vunpack.c.l.b16 %v1156
      %v1350 = vunpack.c.l.b16 %v1157
      %v1351 = vunpack.c.l.b16 %v1158
      %v1352 = vunpack.c.l.b16 %v1159
      %v1353 = vunpack.c.l.b16 %v1160
      %v1354 = vpack.c.b16 %v1339, %v1338
      %v1355 = vpack.c.b16 %v1341, %v1340
      %v1356 = vpack.c.b16 %v1343, %v1342
      %v1357 = vpack.c.b16 %v1345, %v1344
      %v1358 = vpack.c.b16 %v1347, %v1346
      %v1359 = vpack.c.b16 %v1349, %v1348
      %v1360 = vpack.c.b16 %v1351, %v1350
      %v1361 = vpack.c.b16 %v1353, %v1352
      %1370 = vmatprep.subr.bf16.mxu0 0
      %1371 = vmatpush1.bf16.msra.mxu0 %v1361
      %1372 = vmatprep.subr.bf16.mxu0 0
      %1373 = vmatpush1.bf16.msra.mxu0 %v1360
      %1374 = vmatprep.subr.bf16.mxu0 0
      %1375 = vmatpush1.bf16.msra.mxu0 %v1359
      %1376 = vmatprep.subr.bf16.mxu0 0
      %1377 = vmatpush1.bf16.msra.mxu0 %v1358
      %1378 = vmatprep.subr.bf16.mxu0 0
      %1379 = vmatpush1.bf16.msra.mxu0 %v1357
      %1380 = vmatprep.subr.bf16.mxu0 0
      %1381 = vmatpush1.bf16.msra.mxu0 %v1356
      %1382 = vmatprep.subr.bf16.mxu0 0
      %1383 = vmatpush1.bf16.msra.mxu0 %v1355
      %1384 = vmatprep.subr.bf16.mxu0 0
      %1385 = vmatpush1.bf16.msra.mxu0 %v1354
      %1386 = vmatprep.subr.bf16.mxu0 0
      %1387 = vmatpush2.bf16.msra.mxu0 0
      %1388 = vmatprep.subr.bf16.mxu0 0
      %1389 = vmatpush2.bf16.msra.mxu0 0
      %1390 = vmatprep.subr.bf16.mxu0 0
      %1391 = vmatpush2.bf16.msra.mxu0 0
      %1392 = vmatprep.subr.bf16.mxu0 0
      %1393 = vmatpush2.bf16.msra.mxu0 0
      %1394 = vmatprep.subr.bf16.mxu0 0
      %1395 = vmatpush2.bf16.msra.mxu0 0
      %1396 = vmatprep.subr.bf16.mxu0 0
      %1397 = vmatpush2.bf16.msra.mxu0 0
      %1398 = vmatprep.subr.bf16.mxu0 0
      %1399 = vmatpush2.bf16.msra.mxu0 0
      %1400 = vmatprep.subr.bf16.mxu0 0
      %1401 = vmatpush2.bf16.msra.mxu0 0
      %1402 = vmatprep.mubr.bf16.mxu0 0
      %1403 = vmatmul.mubr.bf16.gmra.mxu0 %v1097
      %v1404 = vpop.f32.mrf.mxu0
      %v1405 = vadd.f32 %v1260, %v1404
      %v1406 = vpop.f32.mrf.mxu0
      %v1407 = vpop.f32.mrf.mxu0
      %v1408 = vadd.f32 %v1263, %v1407
      %v1409 = vpop.f32.mrf.mxu0
      %1410 = vmatprep.mubr.bf16.mxu0 0
      %1411 = vmatmul.mubr.bf16.gmra.mxu0 %v1098
      %v1412 = vpop.f32.mrf.mxu0
      %v1413 = vadd.f32 %v1268, %v1412
      %v1414 = vpop.f32.mrf.mxu0
      %v1415 = vpop.f32.mrf.mxu0
      %v1416 = vadd.f32 %v1271, %v1415
      %v1417 = vpop.f32.mrf.mxu0
      %1418 = vmatprep.mubr.bf16.mxu0 0
      %1419 = vmatmul.mubr.bf16.gmra.mxu0 %v1099
      %v1420 = vpop.f32.mrf.mxu0
      %v1421 = vadd.f32 %v1276, %v1420
      %v1422 = vpop.f32.mrf.mxu0
      %v1423 = vpop.f32.mrf.mxu0
      %v1424 = vadd.f32 %v1279, %v1423
      %v1425 = vpop.f32.mrf.mxu0
      %1426 = vmatprep.mubr.bf16.mxu0 0
      %1427 = vmatmul.mubr.bf16.gmra.mxu0 %v1100
      %v1428 = vpop.f32.mrf.mxu0
      %v1429 = vadd.f32 %v1284, %v1428
      %v1430 = vpop.f32.mrf.mxu0
      %v1431 = vpop.f32.mrf.mxu0
      %v1432 = vadd.f32 %v1287, %v1431
      %v1433 = vpop.f32.mrf.mxu0
      %1434 = vmatprep.mubr.bf16.mxu0 0
      %1435 = vmatmul.mubr.bf16.gmra.mxu0 %v1101
      %v1436 = vpop.f32.mrf.mxu0
      %v1437 = vadd.f32 %v1292, %v1436
      %v1438 = vpop.f32.mrf.mxu0
      %v1439 = vpop.f32.mrf.mxu0
      %v1440 = vadd.f32 %v1295, %v1439
      %v1441 = vpop.f32.mrf.mxu0
      %1442 = vmatprep.mubr.bf16.mxu0 0
      %1443 = vmatmul.mubr.bf16.gmra.mxu0 %v1102
      %v1444 = vpop.f32.mrf.mxu0
      %v1445 = vadd.f32 %v1300, %v1444
      %v1446 = vpop.f32.mrf.mxu0
      %v1447 = vpop.f32.mrf.mxu0
      %v1448 = vadd.f32 %v1303, %v1447
      %v1449 = vpop.f32.mrf.mxu0
      %1450 = vmatprep.mubr.bf16.mxu0 0
      %1451 = vmatmul.mubr.bf16.gmra.mxu0 %v1103
      %v1452 = vpop.f32.mrf.mxu0
      %v1453 = vadd.f32 %v1308, %v1452
      %v1454 = vpop.f32.mrf.mxu0
      %v1455 = vpop.f32.mrf.mxu0
      %v1456 = vadd.f32 %v1311, %v1455
      %v1457 = vpop.f32.mrf.mxu0
      %1458 = vmatprep.mubr.bf16.mxu0 0
      %1459 = vmatmul.mubr.bf16.gmra.mxu0 %v1104
      %v1460 = vpop.f32.mrf.mxu0
      %v1461 = vadd.f32 %v1316, %v1460
      %v1462 = vpop.f32.mrf.mxu0
      %v1463 = vpop.f32.mrf.mxu0
      %v1464 = vadd.f32 %v1319, %v1463
      %v1465 = vpop.f32.mrf.mxu0
      %1466 = vdwg.mxu0
      %1467 = vmatprep.subr.bf16.mxu0 0
      %1468 = vmatpush1.bf16.msra.mxu0 %v1361
      %1469 = vmatprep.subr.bf16.mxu0 0
      %1470 = vmatpush1.bf16.msra.mxu0 %v1360
      %1471 = vmatprep.subr.bf16.mxu0 0
      %1472 = vmatpush1.bf16.msra.mxu0 %v1359
      %1473 = vmatprep.subr.bf16.mxu0 0
      %1474 = vmatpush1.bf16.msra.mxu0 %v1358
      %1475 = vmatprep.subr.bf16.mxu0 0
      %1476 = vmatpush1.bf16.msra.mxu0 %v1357
      %1477 = vmatprep.subr.bf16.mxu0 0
      %1478 = vmatpush1.bf16.msra.mxu0 %v1356
      %1479 = vmatprep.subr.bf16.mxu0 0
      %1480 = vmatpush1.bf16.msra.mxu0 %v1355
      %1481 = vmatprep.subr.bf16.mxu0 0
      %1482 = vmatpush1.bf16.msra.mxu0 %v1354
      %1483 = vmatprep.subr.bf16.mxu0 0
      %1484 = vmatpush2.bf16.msra.mxu0 0
      %1485 = vmatprep.subr.bf16.mxu0 0
      %1486 = vmatpush2.bf16.msra.mxu0 0
      %1487 = vmatprep.subr.bf16.mxu0 0
      %1488 = vmatpush2.bf16.msra.mxu0 0
      %1489 = vmatprep.subr.bf16.mxu0 0
      %1490 = vmatpush2.bf16.msra.mxu0 0
      %1491 = vmatprep.subr.bf16.mxu0 0
      %1492 = vmatpush2.bf16.msra.mxu0 0
      %1493 = vmatprep.subr.bf16.mxu0 0
      %1494 = vmatpush2.bf16.msra.mxu0 0
      %1495 = vmatprep.subr.bf16.mxu0 0
      %1496 = vmatpush2.bf16.msra.mxu0 0
      %1497 = vmatprep.subr.bf16.mxu0 0
      %1498 = vmatpush2.bf16.msra.mxu0 0
      %1499 = vmatprep.mubr.bf16.mxu0 0
      %1500 = vmatmul.mubr.bf16.gmra.mxu0 %v1137
      %v1501 = vpop.f32.mrf.mxu0
      %v1502 = vadd.f32 0.0, %v1501
      %v1503 = vpop.f32.mrf.mxu0
      %v1504 = vpop.f32.mrf.mxu0
      %v1505 = vadd.f32 0.0, %v1504
      %v1506 = vpop.f32.mrf.mxu0
      %1507 = vmatprep.mubr.bf16.mxu0 0
      %1508 = vmatmul.mubr.bf16.gmra.mxu0 %v1138
      %v1509 = vpop.f32.mrf.mxu0
      %v1510 = vadd.f32 0.0, %v1509
      %v1511 = vpop.f32.mrf.mxu0
      %v1512 = vpop.f32.mrf.mxu0
      %v1513 = vadd.f32 0.0, %v1512
      %v1514 = vpop.f32.mrf.mxu0
      %1515 = vmatprep.mubr.bf16.mxu0 0
      %1516 = vmatmul.mubr.bf16.gmra.mxu0 %v1139
      %v1517 = vpop.f32.mrf.mxu0
      %v1518 = vadd.f32 0.0, %v1517
      %v1519 = vpop.f32.mrf.mxu0
      %v1520 = vpop.f32.mrf.mxu0
      %v1521 = vadd.f32 0.0, %v1520
      %v1522 = vpop.f32.mrf.mxu0
      %1523 = vmatprep.mubr.bf16.mxu0 0
      %1524 = vmatmul.mubr.bf16.gmra.mxu0 %v1140
      %v1525 = vpop.f32.mrf.mxu0
      %v1526 = vadd.f32 0.0, %v1525
      %v1527 = vpop.f32.mrf.mxu0
      %v1528 = vpop.f32.mrf.mxu0
      %v1529 = vadd.f32 0.0, %v1528
      %v1530 = vpop.f32.mrf.mxu0
      %1531 = vmatprep.mubr.bf16.mxu0 0
      %1532 = vmatmul.mubr.bf16.gmra.mxu0 %v1141
      %v1533 = vpop.f32.mrf.mxu0
      %v1534 = vadd.f32 0.0, %v1533
      %v1535 = vpop.f32.mrf.mxu0
      %v1536 = vpop.f32.mrf.mxu0
      %v1537 = vadd.f32 0.0, %v1536
      %v1538 = vpop.f32.mrf.mxu0
      %1539 = vmatprep.mubr.bf16.mxu0 0
      %1540 = vmatmul.mubr.bf16.gmra.mxu0 %v1142
      %v1541 = vpop.f32.mrf.mxu0
      %v1542 = vadd.f32 0.0, %v1541
      %v1543 = vpop.f32.mrf.mxu0
      %v1544 = vpop.f32.mrf.mxu0
      %v1545 = vadd.f32 0.0, %v1544
      %v1546 = vpop.f32.mrf.mxu0
      %1547 = vmatprep.mubr.bf16.mxu0 0
      %1548 = vmatmul.mubr.bf16.gmra.mxu0 %v1143
      %v1549 = vpop.f32.mrf.mxu0
      %v1550 = vadd.f32 0.0, %v1549
      %v1551 = vpop.f32.mrf.mxu0
      %v1552 = vpop.f32.mrf.mxu0
      %v1553 = vadd.f32 0.0, %v1552
      %v1554 = vpop.f32.mrf.mxu0
      %1555 = vmatprep.mubr.bf16.mxu0 0
      %1556 = vmatmul.mubr.bf16.gmra.mxu0 %v1144
      %v1557 = vpop.f32.mrf.mxu0
      %v1558 = vadd.f32 0.0, %v1557
      %v1559 = vpop.f32.mrf.mxu0
      %v1560 = vpop.f32.mrf.mxu0
      %v1561 = vadd.f32 0.0, %v1560
      %v1562 = vpop.f32.mrf.mxu0
      %1563 = vdwg.mxu0
      %v1564 = vadd.f32 %v1405, %v1502
      %v1565 = vadd.f32 %v1408, %v1505
      %v1566 = vadd.f32 %v1413, %v1510
      %v1567 = vadd.f32 %v1416, %v1513
      %v1568 = vadd.f32 %v1421, %v1518
      %v1569 = vadd.f32 %v1424, %v1521
      %v1570 = vadd.f32 %v1429, %v1526
      %v1571 = vadd.f32 %v1432, %v1529
      %v1572 = vadd.f32 %v1437, %v1534
      %v1573 = vadd.f32 %v1440, %v1537
      %v1574 = vadd.f32 %v1445, %v1542
      %v1575 = vadd.f32 %v1448, %v1545
      %v1576 = vadd.f32 %v1453, %v1550
      %v1577 = vadd.f32 %v1456, %v1553
      %v1578 = vadd.f32 %v1461, %v1558
      %v1579 = vadd.f32 %v1464, %v1561
      %v1580 = vpack.c.bf16 %v1565, %v1564
      %v1581 = vpack.c.bf16 %v1567, %v1566
      %v1582 = vpack.c.bf16 %v1569, %v1568
      %v1583 = vpack.c.bf16 %v1571, %v1570
      %v1584 = vpack.c.bf16 %v1573, %v1572
      %v1585 = vpack.c.bf16 %v1575, %v1574
      %v1586 = vpack.c.bf16 %v1577, %v1576
      %v1587 = vpack.c.bf16 %v1579, %v1578
      %v1588 = vunpack.c.l.bf16 %v1580
      %v1589 = vunpack.c.h.bf16 %v1580
      %v1590 = vunpack.c.l.bf16 %v1581
      %v1591 = vunpack.c.h.bf16 %v1581
      %v1592 = vunpack.c.l.bf16 %v1582
      %v1593 = vunpack.c.h.bf16 %v1582
      %v1594 = vunpack.c.l.bf16 %v1583
      %v1595 = vunpack.c.h.bf16 %v1583
      %v1596 = vunpack.c.l.bf16 %v1584
      %v1597 = vunpack.c.h.bf16 %v1584
      %v1598 = vunpack.c.l.bf16 %v1585
      %v1599 = vunpack.c.h.bf16 %v1585
      %v1600 = vunpack.c.l.bf16 %v1586
      %v1601 = vunpack.c.h.bf16 %v1586
      %v1602 = vunpack.c.l.bf16 %v1587
      %v1603 = vunpack.c.h.bf16 %v1587
      %v1604 = vsub.f32 %v1564, %v1588
      %v1605 = vsub.f32 %v1565, %v1589
      %v1606 = vsub.f32 %v1566, %v1590
      %v1607 = vsub.f32 %v1567, %v1591
      %v1608 = vsub.f32 %v1568, %v1592
      %v1609 = vsub.f32 %v1569, %v1593
      %v1610 = vsub.f32 %v1570, %v1594
      %v1611 = vsub.f32 %v1571, %v1595
      %v1612 = vsub.f32 %v1572, %v1596
      %v1613 = vsub.f32 %v1573, %v1597
      %v1614 = vsub.f32 %v1574, %v1598
      %v1615 = vsub.f32 %v1575, %v1599
      %v1616 = vsub.f32 %v1576, %v1600
      %v1617 = vsub.f32 %v1577, %v1601
      %v1618 = vsub.f32 %v1578, %v1602
      %v1619 = vsub.f32 %v1579, %v1603
      %v1620 = vpack.c.bf16 %v1605, %v1604
      %v1621 = vpack.c.bf16 %v1607, %v1606
      %v1622 = vpack.c.bf16 %v1609, %v1608
      %v1623 = vpack.c.bf16 %v1611, %v1610
      %v1624 = vpack.c.bf16 %v1613, %v1612
      %v1625 = vpack.c.bf16 %v1615, %v1614
      %v1626 = vpack.c.bf16 %v1617, %v1616
      %v1627 = vpack.c.bf16 %v1619, %v1618
      %v1636 = vunpack.c.l.b16 %v1580
      %v1637 = vunpack.c.h.b16 %v1580
      %v1638 = vunpack.c.l.b16 %v1581
      %v1639 = vunpack.c.h.b16 %v1581
      %v1640 = vunpack.c.l.b16 %v1582
      %v1641 = vunpack.c.h.b16 %v1582
      %v1642 = vunpack.c.l.b16 %v1583
      %v1643 = vunpack.c.h.b16 %v1583
      %v1644 = vunpack.c.l.b16 %v1584
      %v1645 = vunpack.c.h.b16 %v1584
      %v1646 = vunpack.c.l.b16 %v1585
      %v1647 = vunpack.c.h.b16 %v1585
      %v1648 = vunpack.c.l.b16 %v1586
      %v1649 = vunpack.c.h.b16 %v1586
      %v1650 = vunpack.c.l.b16 %v1587
      %v1651 = vunpack.c.h.b16 %v1587
      %v1652 = vpack.c.b16 %v1636, %v1636
      %v1653 = vpack.c.b16 %v1637, %v1637
      %v1654 = vpack.c.b16 %v1638, %v1638
      %v1655 = vpack.c.b16 %v1639, %v1639
      %v1656 = vpack.c.b16 %v1640, %v1640
      %v1657 = vpack.c.b16 %v1641, %v1641
      %v1658 = vpack.c.b16 %v1642, %v1642
      %v1659 = vpack.c.b16 %v1643, %v1643
      %v1660 = vpack.c.b16 %v1644, %v1644
      %v1661 = vpack.c.b16 %v1645, %v1645
      %v1662 = vpack.c.b16 %v1646, %v1646
      %v1663 = vpack.c.b16 %v1647, %v1647
      %v1664 = vpack.c.b16 %v1648, %v1648
      %v1665 = vpack.c.b16 %v1649, %v1649
      %v1666 = vpack.c.b16 %v1650, %v1650
      %v1667 = vpack.c.b16 %v1651, %v1651
      %1684 = vst [vmem:[%s264] sm:$0xf] %v1652
      %1685 = vst [vmem:[%s264 + $0x4] sm:$0xf] %v1653
      %1686 = vst [vmem:[%s264 + $0x8] sm:$0xf] %v1654
      %1687 = vst [vmem:[%s264 + $0xc] sm:$0xf] %v1655
      %1688 = vst [vmem:[%s264 + $0x10] sm:$0xf] %v1656
      %1689 = vst [vmem:[%s264 + $0x14] sm:$0xf] %v1657
      %1690 = vst [vmem:[%s264 + $0x18] sm:$0xf] %v1658
      %1691 = vst [vmem:[%s264 + $0x1c] sm:$0xf] %v1659
      %1692 = vst [vmem:[%s264 + $0x20] sm:$0xf] %v1660
      %1693 = vst [vmem:[%s264 + $0x24] sm:$0xf] %v1661
      %1694 = vst [vmem:[%s264 + $0x28] sm:$0xf] %v1662
      %1695 = vst [vmem:[%s264 + $0x2c] sm:$0xf] %v1663
      %1696 = vst [vmem:[%s264 + $0x30] sm:$0xf] %v1664
      %1697 = vst [vmem:[%s264 + $0x34] sm:$0xf] %v1665
      %1698 = vst [vmem:[%s264 + $0x38] sm:$0xf] %v1666
      %1699 = vst [vmem:[%s264 + $0x3c] sm:$0xf] %v1667
      %v1708 = vunpack.c.l.b16 %v1620
      %v1709 = vunpack.c.h.b16 %v1620
      %v1710 = vunpack.c.l.b16 %v1621
      %v1711 = vunpack.c.h.b16 %v1621
      %v1712 = vunpack.c.l.b16 %v1622
      %v1713 = vunpack.c.h.b16 %v1622
      %v1714 = vunpack.c.l.b16 %v1623
      %v1715 = vunpack.c.h.b16 %v1623
      %v1716 = vunpack.c.l.b16 %v1624
      %v1717 = vunpack.c.h.b16 %v1624
      %v1718 = vunpack.c.l.b16 %v1625
      %v1719 = vunpack.c.h.b16 %v1625
      %v1720 = vunpack.c.l.b16 %v1626
      %v1721 = vunpack.c.h.b16 %v1626
      %v1722 = vunpack.c.l.b16 %v1627
      %v1723 = vunpack.c.h.b16 %v1627
      %v1724 = vpack.c.b16 %v1708, %v1708
      %v1725 = vpack.c.b16 %v1709, %v1709
      %v1726 = vpack.c.b16 %v1710, %v1710
      %v1727 = vpack.c.b16 %v1711, %v1711
      %v1728 = vpack.c.b16 %v1712, %v1712
      %v1729 = vpack.c.b16 %v1713, %v1713
      %v1730 = vpack.c.b16 %v1714, %v1714
      %v1731 = vpack.c.b16 %v1715, %v1715
      %v1732 = vpack.c.b16 %v1716, %v1716
      %v1733 = vpack.c.b16 %v1717, %v1717
      %v1734 = vpack.c.b16 %v1718, %v1718
      %v1735 = vpack.c.b16 %v1719, %v1719
      %v1736 = vpack.c.b16 %v1720, %v1720
      %v1737 = vpack.c.b16 %v1721, %v1721
      %v1738 = vpack.c.b16 %v1722, %v1722
      %v1739 = vpack.c.b16 %v1723, %v1723
      %1756 = vst [vmem:[%s270] sm:$0xf] %v1724
      %1757 = vst [vmem:[%s270 + $0x4] sm:$0xf] %v1725
      %1758 = vst [vmem:[%s270 + $0x8] sm:$0xf] %v1726
      %1759 = vst [vmem:[%s270 + $0xc] sm:$0xf] %v1727
      %1760 = vst [vmem:[%s270 + $0x10] sm:$0xf] %v1728
      %1761 = vst [vmem:[%s270 + $0x14] sm:$0xf] %v1729
      %1762 = vst [vmem:[%s270 + $0x18] sm:$0xf] %v1730
      %1763 = vst [vmem:[%s270 + $0x1c] sm:$0xf] %v1731
      %1764 = vst [vmem:[%s270 + $0x20] sm:$0xf] %v1732
      %1765 = vst [vmem:[%s270 + $0x24] sm:$0xf] %v1733
      %1766 = vst [vmem:[%s270 + $0x28] sm:$0xf] %v1734
      %1767 = vst [vmem:[%s270 + $0x2c] sm:$0xf] %v1735
      %1768 = vst [vmem:[%s270 + $0x30] sm:$0xf] %v1736
      %1769 = vst [vmem:[%s270 + $0x34] sm:$0xf] %v1737
      %1770 = vst [vmem:[%s270 + $0x38] sm:$0xf] %v1738
      %1771 = vst [vmem:[%s270 + $0x3c] sm:$0xf] %v1739
      %s1772 = smul.u32 16, %s18
      %p1773 = scmp.lt.s32.totalorder %s1772, 47
      %s1774 = scalar_select %p1773, %s1772, 47
      %s1775 = smul.addr %s1774, 4
      %s1776 = scalar_lea.vmem %s5, %s1775
      %s1777 = smul.u32 16, %s18
      %p1778 = scmp.lt.s32.totalorder %s1777, 47
      %s1779 = scalar_select %p1778, %s1777, 47
      %s1780 = smul.addr %s1779, 4
      %s1781 = scalar_lea.vmem %s6, %s1780
      // Predicated region
      $region41: #{gnn_forward.2} parent=39 // pred_check
        %p1782 = pneg %p146
      $region42: #{gnn_forward.2} parent=39 // pred_check_branch
        %1784 = sbr.rel (%p1782) target = $region44
      $region43: #{gnn_forward.2} parent=39 // pred_region
        %s1785 = smul.u32 16, %s18
      $region44: #{gnn_forward.2} parent=39 // pred_fallthru
        _
      // Predicated region
      $region45: #{gnn_forward.2} parent=39 // pred_check
        %p1786 = pneg %p172
      $region46: #{gnn_forward.2} parent=39 // pred_check_branch
        %1788 = sbr.rel (%p1786) target = $region48
      $region47: #{gnn_forward.2} parent=39 // pred_region
        %s1789 = smul.u32 16, %s18
      $region48: #{gnn_forward.2} parent=39 // pred_fallthru
        _
    $region40: #{gnn_forward.2} parent=5 // pred_fallthru
      _
    %p1790 = scmp.le.s32.totalorder 2, %s13
    // Predicated region
    $region49: #{gnn_forward.2} parent=5 // pred_check
      %p1791 = pneg %p1790
    $region50: #{gnn_forward.2} parent=5 // pred_check_branch
      %1793 = sbr.rel (%p1791) target = $region52
    $region51: #{gnn_forward.2} parent=5 // pred_region
      %s1794 = ssub.s32 %s13, 2
      // Predicated region
      $region53: #{gnn_forward.2} parent=51 // pred_check
        %p1795 = pneg %p152
      $region54: #{gnn_forward.2} parent=51 // pred_check_branch
        %1797 = sbr.rel (%p1795) target = $region56
      $region55: #{gnn_forward.2} parent=51 // pred_region
        %s1798 = smul.u32 16, %s19
        %p1799 = scmp.lt.s32.totalorder %s1798, 47
        %s1800 = scalar_select %p1799, %s1798, 47
        %s1801 = smul.addr %s1800, 4
        %s1802 = scalar_lea.vmem %s5, %s1801
      $region56: #{gnn_forward.2} parent=51 // pred_fallthru
        _
      // Predicated region
      $region57: #{gnn_forward.2} parent=51 // pred_check
        %p1803 = pneg %p178
      $region58: #{gnn_forward.2} parent=51 // pred_check_branch
        %1805 = sbr.rel (%p1803) target = $region60
      $region59: #{gnn_forward.2} parent=51 // pred_region
        %s1806 = smul.u32 16, %s19
        %p1807 = scmp.lt.s32.totalorder %s1806, 47
        %s1808 = scalar_select %p1807, %s1806, 47
        %s1809 = smul.addr %s1808, 4
        %s1810 = scalar_lea.vmem %s6, %s1809
      $region60: #{gnn_forward.2} parent=51 // pred_fallthru
        _
    $region52: #{gnn_forward.2} parent=5 // pred_fallthru
      _
  $region6: #{gnn_forward.2} parent=0 // loop_footer
    %s17 = sadd.s32 1, %s13
  $region7: #{gnn_forward.2} parent=0 // loop_footer_branch
    %12 = sbr.rel target = $region3
  $region8: #{gnn_forward.2} parent=0 // loop_exit
    _

</llo_original>
